<compile_context>
chip_gen: v6e
topology: v6e:2x2x1
jax: 0.10.0
libtpu: 0.0.40
codegen_flags: <defaults>
</compile_context>

<pallas_src>
import jax
import jax.numpy as jnp
import numpy as np
from jax.experimental import pallas as pl
from jax.experimental.pallas import tpu as pltpu

NEG_BIG = -1e30  # bias for padded vocab lanes -> exp() underflows to exactly 0


def _attn_decoder_kernel(
    tok_ref,    # SMEM (T,) int32 scalar-prefetched teacher-forced tokens
    emb_ref,    # VMEM (V, 1, H)  embedding table (dynamic leading-dim gather)
    ua_ref,     # VMEM (L, H)     precomputed Ua(enc) + Ua_b (hoisted per sequence)
    enc_ref,    # VMEM (L, H)     encoder hidden states
    h0_ref,     # VMEM (1, H)     initial decoder hidden state
    w1_ref,     # VMEM (2H, 5H)   block-diag RHS for [hidden | embedded]
    wc_ref,     # VMEM (H, H)     Wc_context^T  (context half of attn_combine)
    wx_ref,     # VMEM (H, 3H)    w_ih^T        (GRU input path)
    wo_ref,     # VMEM (2H, VP)   Wo^T zero-padded to VP lanes
    b_ref,      # VMEM (5, BW)    rows: b1(5H) | bc(H) | b_ih(3H) | bo_pad(VP) | va(H)
    logp_ref,   # out  (T, 1, VP) per-step log-softmax rows (VMEM-resident block)
    hout_ref,   # out  (1, H)     final hidden state
    attn_ref,   # out  (T, 1, L)  per-step attention weights (VMEM-resident block)
    h_sc,       # scratch VMEM (1, H) recurrent hidden carry
):
    f32 = jnp.float32
    H = h0_ref.shape[1]
    VP = logp_ref.shape[2]
    t = pl.program_id(0)

    @pl.when(t == 0)
    def _():
        h_sc[...] = h0_ref[...]

    hidden = h_sc[...]                                            # (1, H)

    # TODO(synk): nn.Dropout(p=0.5) on the embedding applied as identity (eval mode).
    tok = tok_ref[t]
    embedded = emb_ref[tok]                                       # (1, H)

    # ---- dot 1: [hidden | embedded] @ block-diag RHS -> (1, 5H) --------------
    he = jnp.concatenate([hidden, embedded], axis=1)              # (1, 2H)
    d1 = jnp.dot(he, w1_ref[...], preferred_element_type=f32) + b_ref[0:1, 0:5 * H]
    wa = d1[:, 0:H]                      # Wa(hidden) + Wa_b
    ghr = d1[:, H:2 * H]                 # W_hr h + b_hr
    ghz = d1[:, 2 * H:3 * H]             # W_hz h + b_hz
    ghn = d1[:, 3 * H:4 * H]             # W_hn h + b_hn
    xe = d1[:, 4 * H:5 * H]              # embedded @ Wc_e^T   (bc added later)

    # ---- attention: scores (1, L) lane-dense, softmax over encoder steps -----
    va = b_ref[4:5, 0:H]                                          # (1, H)
    tt = jnp.tanh(ua_ref[...] + wa)                               # (L, H)
    scores = jax.lax.dot_general(va, tt, (((1,), (1,)), ((), ())),
                                 preferred_element_type=f32)      # (1, L)
    scores = scores - jnp.max(scores, axis=1, keepdims=True)
    e = jnp.exp(scores)
    attn = e * pl.reciprocal(jnp.sum(e, axis=1, keepdims=True), approx=True)
    attn_ref[t] = attn                                            # one (1, L) row

    # ---- context: (1,L) @ (L,H) -> (1,H) --------------------------------------
    context = jnp.dot(attn, enc_ref[...], preferred_element_type=f32)

    # ---- relu(attn_combine(cat(embedded, context))) ---------------------------
    x = jnp.maximum(
        jnp.dot(context, wc_ref[...], preferred_element_type=f32)
        + xe + b_ref[1:2, 0:H], 0.0)                              # (1, H)

    # ---- GRU cell (PyTorch gate order r, z, n) --------------------------------
    xg = jnp.dot(x, wx_ref[...], preferred_element_type=f32) + b_ref[2:3, 0:3 * H]
    r = jax.nn.sigmoid(xg[:, 0:H] + ghr)
    z = jax.nn.sigmoid(xg[:, H:2 * H] + ghz)
    n = jnp.tanh(xg[:, 2 * H:3 * H] + r * ghn)
    h_new = (1.0 - z) * n + z * hidden                            # (1, H)
    h_sc[...] = h_new
    hout_ref[...] = h_new

    # ---- log_softmax(out(cat(context, h_new))) over VP padded lanes -----------
    ch = jnp.concatenate([context, h_new], axis=1)                # (1, 2H)
    logits = jnp.dot(ch, wo_ref[...], preferred_element_type=f32) + b_ref[3:4, 0:VP]
    shifted = logits - jnp.max(logits, axis=1, keepdims=True)
    logp_ref[t] = shifted - jnp.log(jnp.sum(jnp.exp(shifted), axis=1, keepdims=True))


def prepare_decoder(params, encoder_hiddens):
    """Once-per-sequence work: pack parameter slabs + hoist Ua(encoder_hiddens)."""
    p = params
    f32 = jnp.float32
    H = p["Ua_w"].shape[0]
    V = p["embedding"].shape[0]
    enc = encoder_hiddens.astype(f32)
    L = enc.shape[0]
    VP = ((V + 127) // 128) * 128          # lane-dense padded vocab width
    BW = max(5 * H, VP)

    # Loop-invariant over decode steps: Ua(enc) + Ua_b.
    ua_pre = enc @ p["Ua_w"].astype(f32).T + p["Ua_b"].astype(f32)        # (L, H)

    # Block-diag RHS for [hidden | embedded]:
    #   rows 0:H  -> cols [0:H]=Wa^T, [H:4H]=w_hh^T, [4H:5H]=0
    #   rows H:2H -> cols [0:4H]=0,                  [4H:5H]=Wc_e^T
    wc = p["Wc"].astype(f32)                                              # (H, 2H)
    w1 = jnp.zeros((2 * H, 5 * H), f32)
    w1 = w1.at[0:H, 0:H].set(p["Wa_w"].astype(f32).T)
    w1 = w1.at[0:H, H:4 * H].set(p["w_hh"].astype(f32).T)
    w1 = w1.at[H:2 * H, 4 * H:5 * H].set(wc[:, 0:H].T)

    wc_ctx = wc[:, H:2 * H].T                                             # (H, H)
    wx = p["w_ih"].astype(f32).T                                          # (H, 3H)
    wo = jnp.zeros((2 * H, VP), f32).at[:, 0:V].set(p["Wo"].astype(f32).T)

    def row(vec):
        v = jnp.asarray(vec, f32)
        return jnp.zeros((BW,), f32).at[0:v.shape[0]].set(v)[None, :]

    b1 = row(jnp.concatenate([p["Wa_b"].astype(f32), p["b_hh"].astype(f32),
                              jnp.zeros((H,), f32)]))                     # (1, BW)
    bo_pad = (jnp.zeros((BW,), f32).at[0:VP].set(NEG_BIG)
              .at[0:V].set(p["bo"].astype(f32)))[None, :]                 # (1, BW)
    b_slab = jnp.concatenate(
        [b1, row(p["bc"]), row(p["b_ih"]), bo_pad, row(p["va"][0])], axis=0)  # (5, BW)

    emb3 = p["embedding"].astype(f32).reshape(V, 1, H)
    return dict(emb3=emb3, ua_pre=ua_pre, enc=enc, w1=w1, wc_ctx=wc_ctx, wx=wx,
                wo=wo, b_slab=b_slab, H=H, V=V, L=L, VP=VP)


def attn_decoder_decode(tokens, hidden, packed):
    """Run all T teacher-forced decode steps in ONE fused pallas_call.

    tokens: (T,) int32; hidden: (1, 1, H).
    Returns (log_probs (T, V), final_hidden (1, 1, H), attn_weights (T, L, 1))."""
    H, V, L, VP = packed["H"], packed["V"], packed["L"], packed["VP"]
    tokens = jnp.clip(jnp.asarray(tokens, jnp.int32).reshape(-1), 0, V - 1)
    T = int(tokens.shape[0])
    h0 = hidden.reshape(1, H).astype(jnp.float32)
    BW = packed["b_slab"].shape[1]

    grid_spec = pltpu.PrefetchScalarGridSpec(
        num_scalar_prefetch=1,          # (T,) tokens -> SMEM
        grid=(T,),
        in_specs=[
            # constant index_maps: every operand is DMA'd once, VMEM-resident for all T steps
            pl.BlockSpec((V, 1, H), lambda t, tok: (0, 0, 0)),      # embedding table
            pl.BlockSpec((L, H), lambda t, tok: (0, 0)),            # ua_pre
            pl.BlockSpec((L, H), lambda t, tok: (0, 0)),            # enc
            pl.BlockSpec((1, H), lambda t, tok: (0, 0)),            # h0
            pl.BlockSpec((2 * H, 5 * H), lambda t, tok: (0, 0)),    # w1 (block-diag)
            pl.BlockSpec((H, H), lambda t, tok: (0, 0)),            # Wc_context^T
            pl.BlockSpec((H, 3 * H), lambda t, tok: (0, 0)),        # w_ih^T
            pl.BlockSpec((2 * H, VP), lambda t, tok: (0, 0)),       # Wo^T (padded)
            pl.BlockSpec((5, BW), lambda t, tok: (0, 0)),           # bias slab
        ],
        out_specs=[
            pl.BlockSpec((T, 1, VP), lambda t, tok: (0, 0, 0)),     # log-probs (resident)
            pl.BlockSpec((1, H), lambda t, tok: (0, 0)),            # final hidden
            pl.BlockSpec((T, 1, L), lambda t, tok: (0, 0, 0)),      # attention (resident)
        ],
        scratch_shapes=[pltpu.VMEM((1, H), jnp.float32)],           # hidden carry
    )

    logp, h_fin, attn = pl.pallas_call(
        _attn_decoder_kernel,
        grid_spec=grid_spec,
        out_shape=(
            jax.ShapeDtypeStruct((T, 1, VP), jnp.float32),
            jax.ShapeDtypeStruct((1, H), jnp.float32),
            jax.ShapeDtypeStruct((T, 1, L), jnp.float32),
        ),
        compiler_params=pltpu.CompilerParams(
            dimension_semantics=("arbitrary",)),    # sequential recurrence
    )(tokens, packed["emb3"], packed["ua_pre"], packed["enc"], h0,
      packed["w1"], packed["wc_ctx"], packed["wx"], packed["wo"], packed["b_slab"])

    return (logp.reshape(T, VP)[:, :V],
            h_fin.reshape(1, 1, H),
            attn.reshape(T, L, 1))


def attn_decoder_step(token, hidden, packed):
    """Single-step API parity with the PyTorch module's forward()."""
    logp, h_new, attn = attn_decoder_decode(jnp.asarray([token], jnp.int32), hidden, packed)
    return logp[0:1], h_new, attn[0:1]


def init_params(key, hidden_size, output_size):
    """Deterministic parameter init with the same shapes as the nn.Module."""
    H, V = hidden_size, output_size
    ks = jax.random.split(key, 16)

    def u(k, shape, fan_in):
        b = 1.0 / np.sqrt(fan_in)
        return jax.random.uniform(k, shape, jnp.float32, -b, b)

    return {
        "embedding": jax.random.normal(ks[0], (V, H), jnp.float32),
        "Ua_w": u(ks[1], (H, H), H), "Ua_b": u(ks[2], (H,), H),
        "Wa_w": u(ks[3], (H, H), H), "Wa_b": u(ks[4], (H,), H),
        "va": jax.random.normal(ks[5], (1, H), jnp.float32),
        "Wc": u(ks[6], (H, 2 * H), 2 * H), "bc": u(ks[7], (H,), 2 * H),
        "w_ih": u(ks[8], (3 * H, H), H), "w_hh": u(ks[9], (3 * H, H), H),
        "b_ih": u(ks[10], (3 * H,), H), "b_hh": u(ks[11], (3 * H,), H),
        "Wo": u(ks[12], (V, 2 * H), 2 * H), "bo": u(ks[13], (V,), 2 * H),
    }


def reference_forward(token, hidden, enc, p):
    """Pure-JAX reference mirroring the PyTorch forward (dropout in eval mode)."""
    H = p["Ua_w"].shape[0]
    L = enc.shape[0]
    hid = hidden.reshape(1, H)
    emb = p["embedding"][token][None, :]
    t = jnp.tanh(enc @ p["Ua_w"].T + p["Ua_b"] + hid @ p["Wa_w"].T + p["Wa_b"])
    scores = jnp.sum(t * p["va"], axis=1)                        # (L,)
    attn = jax.nn.softmax(scores)                                # (L,)
    context = (attn[:, None] * enc).sum(0, keepdims=True)        # (1, H)
    comb = jnp.concatenate([emb, context], axis=1)
    x = jax.nn.relu(comb @ p["Wc"].T + p["bc"])
    gi = x @ p["w_ih"].T + p["b_ih"]
    gh = hid @ p["w_hh"].T + p["b_hh"]
    r = jax.nn.sigmoid(gi[:, :H] + gh[:, :H])
    z = jax.nn.sigmoid(gi[:, H:2 * H] + gh[:, H:2 * H])
    n = jnp.tanh(gi[:, 2 * H:] + r * gh[:, 2 * H:])
    h_new = (1.0 - z) * n + z * hid
    cat2 = jnp.concatenate([context, h_new], axis=1)
    logits = cat2 @ p["Wo"].T + p["bo"]
    logp = jax.nn.log_softmax(logits, axis=1)
    return logp, h_new.reshape(1, 1, H), attn.reshape(1, L, 1)


if __name__ == "__main__":
    H, V, L, T = 32, 20, 8, 6       # hidden, vocab, encoder steps, decode steps
    key = jax.random.PRNGKey(0)
    pkey, hkey, ekey, tkey = jax.random.split(key, 4)

    params = init_params(pkey, H, V)
    hidden0 = jax.random.normal(hkey, (1, 1, H), jnp.float32)
    encoder_hiddens = jax.random.normal(ekey, (L, H), jnp.float32)
    tokens = jax.random.randint(tkey, (T,), 0, V, jnp.int32)

    packed = prepare_decoder(params, encoder_hiddens)       # once per sequence
    logp, h_fin, attn = attn_decoder_decode(tokens, hidden0, packed)
    jax.block_until_ready((logp, h_fin, attn))

    # Pure-JAX step-by-step reference (teacher forcing) for verification.
    hid = hidden0
    ref_logp, ref_attn = [], []
    for t in range(T):
        rl, hid, ra = reference_forward(tokens[t], hid, encoder_hiddens, params)
        ref_logp.append(rl)
        ref_attn.append(ra)
    ref_logp = jnp.concatenate(ref_logp, axis=0)             # (T, V)
    ref_attn = jnp.concatenate(ref_attn, axis=0)             # (T, L, 1)

    assert np.allclose(np.asarray(logp), np.asarray(ref_logp), atol=5e-3, rtol=5e-3)
    assert np.allclose(np.asarray(h_fin), np.asarray(hid), atol=5e-3, rtol=5e-3)
    assert np.allclose(np.asarray(attn), np.asarray(ref_attn), atol=5e-3, rtol=5e-3)

    print("KERNEL_OK")
</pallas_src>

<mosaic_0001>
module attributes {stable_mosaic.version = 11 : i64} {
  func.func @_attn_decoder_kernel(%arg0: i32, %arg1: memref<6xi32, #tpu.memory_space<smem>>, %arg2: memref<20x1x32xf32, #tpu.memory_space<vmem>>, %arg3: memref<8x32xf32, #tpu.memory_space<vmem>>, %arg4: memref<8x32xf32, #tpu.memory_space<vmem>>, %arg5: memref<1x32xf32, #tpu.memory_space<vmem>>, %arg6: memref<64x160xf32, #tpu.memory_space<vmem>>, %arg7: memref<32x32xf32, #tpu.memory_space<vmem>>, %arg8: memref<32x96xf32, #tpu.memory_space<vmem>>, %arg9: memref<64x128xf32, #tpu.memory_space<vmem>>, %arg10: memref<5x160xf32, #tpu.memory_space<vmem>>, %arg11: memref<6x1x128xf32, #tpu.memory_space<vmem>>, %arg12: memref<1x32xf32, #tpu.memory_space<vmem>>, %arg13: memref<6x1x8xf32, #tpu.memory_space<vmem>>, %arg14: memref<1x32xf32, #tpu.memory_space<vmem>>) attributes {dimension_semantics = [#tpu.dimension_semantics<arbitrary>], iteration_bounds = array<i64: 6>, scalar_prefetch = 1 : i64, scratch_operands = 1 : i64, tpu.core_type = #tpu.core_type<tc>, window_params = [{pipeline_mode = #tpu.pipeline_mode<synchronous>, transform_indices = @transform_0, window_bounds = array<i64: 20, 1, 32>}, {pipeline_mode = #tpu.pipeline_mode<synchronous>, transform_indices = @transform_1, window_bounds = array<i64: 8, 32>}, {pipeline_mode = #tpu.pipeline_mode<synchronous>, transform_indices = @transform_2, window_bounds = array<i64: 8, 32>}, {pipeline_mode = #tpu.pipeline_mode<synchronous>, transform_indices = @transform_3, window_bounds = array<i64: 1, 32>}, {pipeline_mode = #tpu.pipeline_mode<synchronous>, transform_indices = @transform_4, window_bounds = array<i64: 64, 160>}, {pipeline_mode = #tpu.pipeline_mode<synchronous>, transform_indices = @transform_5, window_bounds = array<i64: 32, 32>}, {pipeline_mode = #tpu.pipeline_mode<synchronous>, transform_indices = @transform_6, window_bounds = array<i64: 32, 96>}, {pipeline_mode = #tpu.pipeline_mode<synchronous>, transform_indices = @transform_7, window_bounds = array<i64: 64, 128>}, {pipeline_mode = #tpu.pipeline_mode<synchronous>, transform_indices = @transform_8, window_bounds = array<i64: 5, 160>}, {pipeline_mode = #tpu.pipeline_mode<synchronous>, transform_indices = @transform_9, window_bounds = array<i64: 6, 1, 128>}, {pipeline_mode = #tpu.pipeline_mode<synchronous>, transform_indices = @transform_10, window_bounds = array<i64: 1, 32>}, {pipeline_mode = #tpu.pipeline_mode<synchronous>, transform_indices = @transform_11, window_bounds = array<i64: 6, 1, 8>}]} {
    %c0_i32 = arith.constant 0 : i32
    %0 = arith.cmpi eq, %arg0, %c0_i32 : i32
    %1 = arith.extui %0 : i1 to i32
    %c0_i32_0 = arith.constant 0 : i32
    %2 = arith.cmpi ne, %1, %c0_i32_0 : i32
    scf.if %2 {
      %c0_43 = arith.constant 0 : index
      %c0_44 = arith.constant 0 : index
      %96 = vector.load %arg5[%c0_43, %c0_44] : memref<1x32xf32, #tpu.memory_space<vmem>>, vector<1x32xf32>
      %c0_45 = arith.constant 0 : index
      %c0_46 = arith.constant 0 : index
      %97 = vector.load %arg14[%c0_45, %c0_46] : memref<1x32xf32, #tpu.memory_space<vmem>>, vector<1x32xf32>
      tpu.vector_store %arg14[%c0_45, %c0_46], %96 {strides = array<i32>} : memref<1x32xf32, #tpu.memory_space<vmem>>, vector<1x32xf32>,
    } else {
    }
    %c0 = arith.constant 0 : index
    %c0_1 = arith.constant 0 : index
    %3 = vector.load %arg14[%c0, %c0_1] : memref<1x32xf32, #tpu.memory_space<vmem>>, vector<1x32xf32>
    %4 = arith.index_cast %arg0 : i32 to index
    %5 = memref.load %arg1[%4] : memref<6xi32, #tpu.memory_space<smem>>
    %6 = arith.index_cast %5 : i32 to index
    %c0_2 = arith.constant 0 : index
    %c0_3 = arith.constant 0 : index
    %7 = vector.load %arg2[%6, %c0_2, %c0_3] : memref<20x1x32xf32, #tpu.memory_space<vmem>>, vector<1x1x32xf32>
    %8 = vector.shape_cast %7 : vector<1x1x32xf32> to vector<1x32xf32>
    %9 = tpu.concatenate %3, %8 in 1 : vector<1x32xf32>, vector<1x32xf32> -> vector<1x64xf32>
    %c0_4 = arith.constant 0 : index
    %c0_5 = arith.constant 0 : index
    %10 = vector.load %arg6[%c0_4, %c0_5] : memref<64x160xf32, #tpu.memory_space<vmem>>, vector<64x160xf32>
    %cst = arith.constant dense<0.000000e+00> : vector<1x160xf32>
    %11 = tpu.matmul %9, %10, %cst {dimension_numbers = #tpu.dot_dimension_numbers<[1], [0], [0], [1], [0, 0, 1, 1], [], []>} : vector<1x64xf32>, vector<64x160xf32>, vector<1x160xf32> -> vector<1x160xf32>
    %c0_6 = arith.constant 0 : index
    %c0_7 = arith.constant 0 : index
    %12 = vector.load %arg10[%c0_6, %c0_7] : memref<5x160xf32, #tpu.memory_space<vmem>>, vector<1x160xf32>
    %13 = arith.addf %11, %12 : vector<1x160xf32>
    %14 = vector.extract_strided_slice %13 {offsets = [0, 0], sizes = [1, 32], strides = [1, 1]} : vector<1x160xf32> to vector<1x32xf32>
    %15 = vector.extract_strided_slice %13 {offsets = [0, 32], sizes = [1, 32], strides = [1, 1]} : vector<1x160xf32> to vector<1x32xf32>
    %16 = vector.extract_strided_slice %13 {offsets = [0, 64], sizes = [1, 32], strides = [1, 1]} : vector<1x160xf32> to vector<1x32xf32>
    %17 = vector.extract_strided_slice %13 {offsets = [0, 96], sizes = [1, 32], strides = [1, 1]} : vector<1x160xf32> to vector<1x32xf32>
    %18 = vector.extract_strided_slice %13 {offsets = [0, 128], sizes = [1, 32], strides = [1, 1]} : vector<1x160xf32> to vector<1x32xf32>
    %c4 = arith.constant 4 : index
    %c0_8 = arith.constant 0 : index
    %19 = vector.load %arg10[%c4, %c0_8] : memref<5x160xf32, #tpu.memory_space<vmem>>, vector<1x32xf32>
    %c0_9 = arith.constant 0 : index
    %c0_10 = arith.constant 0 : index
    %20 = vector.load %arg3[%c0_9, %c0_10] : memref<8x32xf32, #tpu.memory_space<vmem>>, vector<8x32xf32>
    %21 = vector.broadcast %14 : vector<1x32xf32> to vector<8x32xf32>
    %22 = arith.addf %20, %21 : vector<8x32xf32>
    %23 = math.tanh %22 : vector<8x32xf32>
    %cst_11 = arith.constant dense<0.000000e+00> : vector<1x8xf32>
    %24 = tpu.matmul %19, %23, %cst_11 {dimension_numbers = #tpu.dot_dimension_numbers<[1], [1], [0], [0], [0, 0, 1, 0], [], []>} : vector<1x32xf32>, vector<8x32xf32>, vector<1x8xf32> -> vector<1x8xf32>
    %cst_12 = arith.constant dense<0xFF800000> : vector<1xf32>
    %25 = vector.multi_reduction <maximumf>, %24, %cst_12 [1] : vector<1x8xf32> to vector<1xf32>
    %26 = vector.shape_cast %25 : vector<1xf32> to vector<1x1xf32>
    %27 = vector.broadcast %26 : vector<1x1xf32> to vector<1x8xf32>
    %28 = arith.subf %24, %27 : vector<1x8xf32>
    %29 = math.exp %28 : vector<1x8xf32>
    %cst_13 = arith.constant dense<0.000000e+00> : vector<1xf32>
    %30 = vector.multi_reduction <add>, %29, %cst_13 [1] : vector<1x8xf32> to vector<1xf32>
    %31 = vector.shape_cast %30 : vector<1xf32> to vector<1x1xf32>
    %32 = tpu.reciprocal %31 {approx = true} : vector<1x1xf32> -> vector<1x1xf32>
    %33 = vector.broadcast %32 : vector<1x1xf32> to vector<1x8xf32>
    %34 = arith.mulf %29, %33 : vector<1x8xf32>
    %35 = arith.index_cast %arg0 : i32 to index
    %c0_14 = arith.constant 0 : index
    %c0_15 = arith.constant 0 : index
    %36 = vector.load %arg13[%35, %c0_14, %c0_15] : memref<6x1x8xf32, #tpu.memory_space<vmem>>, vector<1x1x8xf32>
    %37 = vector.shape_cast %36 : vector<1x1x8xf32> to vector<1x8xf32>
    %38 = vector.shape_cast %34 : vector<1x8xf32> to vector<1x1x8xf32>
    tpu.vector_store %arg13[%35, %c0_14, %c0_15], %38 {strides = array<i32>} : memref<6x1x8xf32, #tpu.memory_space<vmem>>, vector<1x1x8xf32>,
    %c0_16 = arith.constant 0 : index
    %c0_17 = arith.constant 0 : index
    %39 = vector.load %arg4[%c0_16, %c0_17] : memref<8x32xf32, #tpu.memory_space<vmem>>, vector<8x32xf32>
    %cst_18 = arith.constant dense<0.000000e+00> : vector<1x32xf32>
    %40 = tpu.matmul %34, %39, %cst_18 {dimension_numbers = #tpu.dot_dimension_numbers<[1], [0], [0], [1], [0, 0, 1, 1], [], []>} : vector<1x8xf32>, vector<8x32xf32>, vector<1x32xf32> -> vector<1x32xf32>
    %c0_19 = arith.constant 0 : index
    %c0_20 = arith.constant 0 : index
    %41 = vector.load %arg7[%c0_19, %c0_20] : memref<32x32xf32, #tpu.memory_space<vmem>>, vector<32x32xf32>
    %cst_21 = arith.constant dense<0.000000e+00> : vector<1x32xf32>
    %42 = tpu.matmul %40, %41, %cst_21 {dimension_numbers = #tpu.dot_dimension_numbers<[1], [0], [0], [1], [0, 0, 1, 1], [], []>} : vector<1x32xf32>, vector<32x32xf32>, vector<1x32xf32> -> vector<1x32xf32>
    %43 = arith.addf %42, %18 : vector<1x32xf32>
    %c1 = arith.constant 1 : index
    %c0_22 = arith.constant 0 : index
    %44 = vector.load %arg10[%c1, %c0_22] : memref<5x160xf32, #tpu.memory_space<vmem>>, vector<1x32xf32>
    %45 = arith.addf %43, %44 : vector<1x32xf32>
    %cst_23 = arith.constant 0.000000e+00 : f32
    %46 = vector.broadcast %cst_23 : f32 to vector<1x32xf32>
    %47 = arith.maximumf %45, %46 : vector<1x32xf32>
    %c0_24 = arith.constant 0 : index
    %c0_25 = arith.constant 0 : index
    %48 = vector.load %arg8[%c0_24, %c0_25] : memref<32x96xf32, #tpu.memory_space<vmem>>, vector<32x96xf32>
    %cst_26 = arith.constant dense<0.000000e+00> : vector<1x96xf32>
    %49 = tpu.matmul %47, %48, %cst_26 {dimension_numbers = #tpu.dot_dimension_numbers<[1], [0], [0], [1], [0, 0, 1, 1], [], []>} : vector<1x32xf32>, vector<32x96xf32>, vector<1x96xf32> -> vector<1x96xf32>
    %c2 = arith.constant 2 : index
    %c0_27 = arith.constant 0 : index
    %50 = vector.load %arg10[%c2, %c0_27] : memref<5x160xf32, #tpu.memory_space<vmem>>, vector<1x96xf32>
    %51 = arith.addf %49, %50 : vector<1x96xf32>
    %52 = vector.extract_strided_slice %51 {offsets = [0, 0], sizes = [1, 32], strides = [1, 1]} : vector<1x96xf32> to vector<1x32xf32>
    %53 = arith.addf %52, %15 : vector<1x32xf32>
    %54 = arith.negf %53 : vector<1x32xf32>
    %55 = math.exp %54 : vector<1x32xf32>
    %cst_28 = arith.constant 1.000000e+00 : f32
    %56 = vector.broadcast %cst_28 : f32 to vector<1x32xf32>
    %57 = arith.addf %56, %55 : vector<1x32xf32>
    %58 = arith.divf %56, %57 : vector<1x32xf32>
    %59 = vector.extract_strided_slice %51 {offsets = [0, 32], sizes = [1, 32], strides = [1, 1]} : vector<1x96xf32> to vector<1x32xf32>
    %60 = arith.addf %59, %16 : vector<1x32xf32>
    %61 = arith.negf %60 : vector<1x32xf32>
    %62 = math.exp %61 : vector<1x32xf32>
    %cst_29 = arith.constant 1.000000e+00 : f32
    %63 = vector.broadcast %cst_29 : f32 to vector<1x32xf32>
    %64 = arith.addf %63, %62 : vector<1x32xf32>
    %65 = arith.divf %63, %64 : vector<1x32xf32>
    %66 = vector.extract_strided_slice %51 {offsets = [0, 64], sizes = [1, 32], strides = [1, 1]} : vector<1x96xf32> to vector<1x32xf32>
    %67 = arith.mulf %58, %17 : vector<1x32xf32>
    %68 = arith.addf %66, %67 : vector<1x32xf32>
    %69 = math.tanh %68 : vector<1x32xf32>
    %cst_30 = arith.constant 1.000000e+00 : f32
    %70 = vector.broadcast %cst_30 : f32 to vector<1x32xf32>
    %71 = arith.subf %70, %65 : vector<1x32xf32>
    %72 = arith.mulf %71, %69 : vector<1x32xf32>
    %73 = arith.mulf %65, %3 : vector<1x32xf32>
    %74 = arith.addf %72, %73 : vector<1x32xf32>
    %c0_31 = arith.constant 0 : index
    %c0_32 = arith.constant 0 : index
    %75 = vector.load %arg14[%c0_31, %c0_32] : memref<1x32xf32, #tpu.memory_space<vmem>>, vector<1x32xf32>
    tpu.vector_store %arg14[%c0_31, %c0_32], %74 {strides = array<i32>} : memref<1x32xf32, #tpu.memory_space<vmem>>, vector<1x32xf32>,
    %c0_33 = arith.constant 0 : index
    %c0_34 = arith.constant 0 : index
    %76 = vector.load %arg12[%c0_33, %c0_34] : memref<1x32xf32, #tpu.memory_space<vmem>>, vector<1x32xf32>
    tpu.vector_store %arg12[%c0_33, %c0_34], %74 {strides = array<i32>} : memref<1x32xf32, #tpu.memory_space<vmem>>, vector<1x32xf32>,
    %77 = tpu.concatenate %40, %74 in 1 : vector<1x32xf32>, vector<1x32xf32> -> vector<1x64xf32>
    %c0_35 = arith.constant 0 : index
    %c0_36 = arith.constant 0 : index
    %78 = vector.load %arg9[%c0_35, %c0_36] : memref<64x128xf32, #tpu.memory_space<vmem>>, vector<64x128xf32>
    %cst_37 = arith.constant dense<0.000000e+00> : vector<1x128xf32>
    %79 = tpu.matmul %77, %78, %cst_37 {dimension_numbers = #tpu.dot_dimension_numbers<[1], [0], [0], [1], [0, 0, 1, 1], [], []>} : vector<1x64xf32>, vector<64x128xf32>, vector<1x128xf32> -> vector<1x128xf32>
    %c3 = arith.constant 3 : index
    %c0_38 = arith.constant 0 : index
    %80 = vector.load %arg10[%c3, %c0_38] : memref<5x160xf32, #tpu.memory_space<vmem>>, vector<1x128xf32>
    %81 = arith.addf %79, %80 : vector<1x128xf32>
    %cst_39 = arith.constant dense<0xFF800000> : vector<1xf32>
    %82 = vector.multi_reduction <maximumf>, %81, %cst_39 [1] : vector<1x128xf32> to vector<1xf32>
    %83 = vector.shape_cast %82 : vector<1xf32> to vector<1x1xf32>
    %84 = vector.broadcast %83 : vector<1x1xf32> to vector<1x128xf32>
    %85 = arith.subf %81, %84 : vector<1x128xf32>
    %86 = math.exp %85 : vector<1x128xf32>
    %cst_40 = arith.constant dense<0.000000e+00> : vector<1xf32>
    %87 = vector.multi_reduction <add>, %86, %cst_40 [1] : vector<1x128xf32> to vector<1xf32>
    %88 = vector.shape_cast %87 : vector<1xf32> to vector<1x1xf32>
    %89 = math.log %88 : vector<1x1xf32>
    %90 = vector.broadcast %89 : vector<1x1xf32> to vector<1x128xf32>
    %91 = arith.subf %85, %90 : vector<1x128xf32>
    %92 = arith.index_cast %arg0 : i32 to index
    %c0_41 = arith.constant 0 : index
    %c0_42 = arith.constant 0 : index
    %93 = vector.load %arg11[%92, %c0_41, %c0_42] : memref<6x1x128xf32, #tpu.memory_space<vmem>>, vector<1x1x128xf32>
    %94 = vector.shape_cast %93 : vector<1x1x128xf32> to vector<1x128xf32>
    %95 = vector.shape_cast %91 : vector<1x128xf32> to vector<1x1x128xf32>
    tpu.vector_store %arg11[%92, %c0_41, %c0_42], %95 {strides = array<i32>} : memref<6x1x128xf32, #tpu.memory_space<vmem>>, vector<1x1x128xf32>,
    return
  }
  func.func @transform_0(%arg0: i32, %arg1: memref<6xi32, #tpu.memory_space<smem>>) -> (i32, i32, i32) {
    %c0_i32 = arith.constant 0 : i32
    %c0_i32_0 = arith.constant 0 : i32
    %c0_i32_1 = arith.constant 0 : i32
    %c0_i32_2 = arith.constant 0 : i32
    return %c0_i32, %c0_i32_0, %c0_i32_1 : i32, i32, i32
  }
  func.func @transform_1(%arg0: i32, %arg1: memref<6xi32, #tpu.memory_space<smem>>) -> (i32, i32) {
    %c0_i32 = arith.constant 0 : i32
    %c0_i32_0 = arith.constant 0 : i32
    %c0_i32_1 = arith.constant 0 : i32
    return %c0_i32, %c0_i32_0 : i32, i32
  }
  func.func @transform_2(%arg0: i32, %arg1: memref<6xi32, #tpu.memory_space<smem>>) -> (i32, i32) {
    %c0_i32 = arith.constant 0 : i32
    %c0_i32_0 = arith.constant 0 : i32
    %c0_i32_1 = arith.constant 0 : i32
    return %c0_i32, %c0_i32_0 : i32, i32
  }
  func.func @transform_3(%arg0: i32, %arg1: memref<6xi32, #tpu.memory_space<smem>>) -> (i32, i32) {
    %c0_i32 = arith.constant 0 : i32
    %c0_i32_0 = arith.constant 0 : i32
    %c0_i32_1 = arith.constant 0 : i32
    return %c0_i32, %c0_i32_0 : i32, i32
  }
  func.func @transform_4(%arg0: i32, %arg1: memref<6xi32, #tpu.memory_space<smem>>) -> (i32, i32) {
    %c0_i32 = arith.constant 0 : i32
    %c0_i32_0 = arith.constant 0 : i32
    %c0_i32_1 = arith.constant 0 : i32
    return %c0_i32, %c0_i32_0 : i32, i32
  }
  func.func @transform_5(%arg0: i32, %arg1: memref<6xi32, #tpu.memory_space<smem>>) -> (i32, i32) {
    %c0_i32 = arith.constant 0 : i32
    %c0_i32_0 = arith.constant 0 : i32
    %c0_i32_1 = arith.constant 0 : i32
    return %c0_i32, %c0_i32_0 : i32, i32
  }
  func.func @transform_6(%arg0: i32, %arg1: memref<6xi32, #tpu.memory_space<smem>>) -> (i32, i32) {
    %c0_i32 = arith.constant 0 : i32
    %c0_i32_0 = arith.constant 0 : i32
    %c0_i32_1 = arith.constant 0 : i32
    return %c0_i32, %c0_i32_0 : i32, i32
  }
  func.func @transform_7(%arg0: i32, %arg1: memref<6xi32, #tpu.memory_space<smem>>) -> (i32, i32) {
    %c0_i32 = arith.constant 0 : i32
    %c0_i32_0 = arith.constant 0 : i32
    %c0_i32_1 = arith.constant 0 : i32
    return %c0_i32, %c0_i32_0 : i32, i32
  }
  func.func @transform_8(%arg0: i32, %arg1: memref<6xi32, #tpu.memory_space<smem>>) -> (i32, i32) {
    %c0_i32 = arith.constant 0 : i32
    %c0_i32_0 = arith.constant 0 : i32
    %c0_i32_1 = arith.constant 0 : i32
    return %c0_i32, %c0_i32_0 : i32, i32
  }
  func.func @transform_9(%arg0: i32, %arg1: memref<6xi32, #tpu.memory_space<smem>>) -> (i32, i32, i32) {
    %c0_i32 = arith.constant 0 : i32
    %c0_i32_0 = arith.constant 0 : i32
    %c0_i32_1 = arith.constant 0 : i32
    %c0_i32_2 = arith.constant 0 : i32
    return %c0_i32, %c0_i32_0, %c0_i32_1 : i32, i32, i32
  }
  func.func @transform_10(%arg0: i32, %arg1: memref<6xi32, #tpu.memory_space<smem>>) -> (i32, i32) {
    %c0_i32 = arith.constant 0 : i32
    %c0_i32_0 = arith.constant 0 : i32
    %c0_i32_1 = arith.constant 0 : i32
    return %c0_i32, %c0_i32_0 : i32, i32
  }
  func.func @transform_11(%arg0: i32, %arg1: memref<6xi32, #tpu.memory_space<smem>>) -> (i32, i32, i32) {
    %c0_i32 = arith.constant 0 : i32
    %c0_i32_0 = arith.constant 0 : i32
    %c0_i32_1 = arith.constant 0 : i32
    %c0_i32_2 = arith.constant 0 : i32
    return %c0_i32, %c0_i32_0, %c0_i32_1 : i32, i32, i32
  }
}

</mosaic_0001>

<llo_original>
// kernel: tpu_custom_call.1
$region0: #{tpu_custom_call.1}
  #allocation0 [shape = 'u32[]', space=smem, size = 0x4, offset = 0x4, fixed_abs, tag = 'smem constant byte address 0x4 - core index']
  #allocation1 [shape = 'u32[144,128]{1,0:T(1,128)}', space=vmem, size = 0x12000, scoped, tag = 'internal scratch']
  #allocation2 [shape = 'f32[1,32]{1,0:T(1,128)}', space=vmem, size = 0x200, scoped, tag = 'scratch operand']
  #allocation3 [shape = 's32[1]{0}', space=sflag, size = 0x4, scoped, tag = 'scoped memory for tpu_custom_call.1']
  #allocation4 [shape = 'u8[512]{0}', space=smem, size = 0x200, scoped, tag = 'prefetched SMEM operand 0']
  %s0 = inlined_call_operand.hbm [shape: s32[6], index: 0, kind: input, shape index: {}]
  %s1 = inlined_call_operand.hbm [shape: f32[20,1,32], index: 1, kind: input, shape index: {}]
  %s2 = inlined_call_operand.hbm [shape: f32[8,32], index: 2, kind: input, shape index: {}]
  %s3 = inlined_call_operand.hbm [shape: f32[8,32], index: 3, kind: input, shape index: {}]
  %s4 = inlined_call_operand.hbm [shape: f32[1,32], index: 4, kind: input, shape index: {}]
  %s5 = inlined_call_operand.hbm [shape: f32[64,160], index: 5, kind: input, shape index: {}]
  %s6 = inlined_call_operand.hbm [shape: f32[32,32], index: 6, kind: input, shape index: {}]
  %s7 = inlined_call_operand.hbm [shape: f32[32,96], index: 7, kind: input, shape index: {}]
  %s8 = inlined_call_operand.hbm [shape: f32[64,128], index: 8, kind: input, shape index: {}]
  %s9 = inlined_call_operand.vmem [shape: f32[5,160], index: 9, kind: input, shape index: {}]
  %s10 = inlined_call_operand.hbm [shape: f32[6,1,128], index: 10, kind: output, shape index: {0}]
  %s11 = inlined_call_operand.hbm [shape: f32[1,32], index: 11, kind: output, shape index: {1}]
  %s12 = inlined_call_operand.hbm [shape: f32[6,1,8], index: 12, kind: output, shape index: {2}]
  %13 = xla_tuple %s10, %s11, %s12
  %s14 = sld [smem:[#allocation0]]
  $region121: #{tpu_custom_call.1} parent=0
    _
  %s16 = ssub.s32 1, %s14
  %s17 = scalar_select 0, %s16, %s14
  %19 = dma.hbm_to_smem %s0, 16, [#allocation4], [#allocation3]
  %20 = dma.done [#allocation3], 16
  %21 = sfence
  $region1: #{tpu_custom_call.1} parent=0
    #allocation5 [shape = 'u8[10240]{0}', space=vmem, size = 0x2800, scoped, tag = 'input window, operand 1, single buffered']
    #allocation6 [shape = 's32[2]{0}', space=sflag, size = 0x8, scoped, tag = 'scoped memory for tpu_custom_call.1']
    #allocation7 [shape = 's32[2]{0}', space=sflag, size = 0x8, scoped, tag = 'scoped memory for tpu_custom_call.1']
    #allocation8 [shape = 'u8[4096]{0}', space=vmem, size = 0x1000, scoped, tag = 'input window, operand 2, single buffered']
    #allocation9 [shape = 's32[1]{0}', space=sflag, size = 0x4, scoped, tag = 'scoped memory for tpu_custom_call.1']
    #allocation10 [shape = 'u8[4096]{0}', space=vmem, size = 0x1000, scoped, tag = 'input window, operand 3, single buffered']
    #allocation11 [shape = 'u8[512]{0}', space=vmem, size = 0x400, scoped, tag = 'input window, operand 4, single buffered']
    #allocation12 [shape = 's32[1]{0}', space=sflag, size = 0x4, scoped, tag = 'scoped memory for tpu_custom_call.1']
    #allocation13 [shape = 'u8[65536]{0}', space=vmem, size = 0x10000, scoped, tag = 'input window, operand 5, single buffered']
    #allocation14 [shape = 'u8[16384]{0}', space=vmem, size = 0x4000, scoped, tag = 'input window, operand 6, single buffered']
    #allocation15 [shape = 's32[1]{0}', space=sflag, size = 0x4, scoped, tag = 'scoped memory for tpu_custom_call.1']
    #allocation16 [shape = 'u8[16384]{0}', space=vmem, size = 0x4000, scoped, tag = 'input window, operand 7, single buffered']
    #allocation17 [shape = 'u8[32768]{0}', space=vmem, size = 0x8000, scoped, tag = 'input window, operand 8, single buffered']
    #allocation18 [shape = 's32[1]{0}', space=sflag, size = 0x4, scoped, tag = 'scoped memory for tpu_custom_call.1']
    #allocation19 [shape = 'u8[3072]{0}', space=vmem, size = 0xc00, scoped, tag = 'output window, operand 0, single buffered']
    #allocation20 [shape = 'u8[512]{0}', space=vmem, size = 0x400, scoped, tag = 'output window, operand 1, single buffered']
    #allocation21 [shape = 's32[1]{0}', space=sflag, size = 0x4, scoped, tag = 'scoped memory for tpu_custom_call.1']
    #allocation22 [shape = 'u8[3072]{0}', space=vmem, size = 0xc00, scoped, tag = 'output window, operand 2, single buffered']
    %22 = vsyncpa [#allocation6], 0
    %23 = vsyncpa [#allocation9], 0
    %24 = vsyncpa [#allocation12], 0
    %25 = vsyncpa [#allocation15], 0
    %26 = vsyncpa [#allocation18], 0
    %27 = vsyncpa [#allocation7], 0
    %28 = vsyncpa [#allocation21], 0
    loop: start=0, step=1, limit=8
    $region2: #{tpu_custom_call.1} parent=1 // loop_pre_header
      _
    $region3: #{tpu_custom_call.1} parent=1 // loop_header
      %s30 = sphi 0, %s34
      %p31 = scmp.ge.s32.totalorder %s30, 8
      %s38 = sphi 0, %s38
      %s40 = sphi 0, %s38
      %s41 = sphi 0, %s40
      %s55 = sphi 0, %s41
      %s59 = sphi 0, %s59
      %s61 = sphi 0, %s59
      %s62 = sphi 0, %s61
      %s76 = sphi 0, %s62
      %s80 = sphi 0, %s80
      %s82 = sphi 0, %s80
      %s83 = sphi 0, %s82
      %s97 = sphi 0, %s83
      %s101 = sphi 0, %s101
      %s103 = sphi 0, %s101
      %s104 = sphi 0, %s103
      %s118 = sphi 0, %s104
      %s122 = sphi 0, %s122
      %s124 = sphi 0, %s122
      %s125 = sphi 0, %s124
      %s139 = sphi 0, %s125
      %s143 = sphi 0, %s143
      %s145 = sphi 0, %s143
      %s146 = sphi 0, %s145
      %s160 = sphi 0, %s146
      %s164 = sphi 0, %s164
      %s166 = sphi 0, %s164
      %s167 = sphi 0, %s166
      %s181 = sphi 0, %s167
      %s185 = sphi 0, %s185
      %s187 = sphi 0, %s185
      %s188 = sphi 0, %s187
      %s202 = sphi 0, %s188
      %s206 = sphi 0, %s206
      %s208 = sphi 0, %s206
      %s209 = sphi 0, %s208
      %s223 = sphi 0, %s209
      %s227 = sphi 0, %s227
      %s229 = sphi 0, %s227
      %s230 = sphi 0, %s229
      %s244 = sphi 0, %s230
      %s248 = sphi 0, %s248
      %s250 = sphi 0, %s248
      %s251 = sphi 0, %s250
      %s265 = sphi 0, %s251
      %s269 = sphi 0, %s269
      %s271 = sphi 0, %s269
      %s272 = sphi 0, %s271
      %s286 = sphi 0, %s272
    $region4: #{tpu_custom_call.1} parent=1 // loop_header_branch
      %33 = sbr.rel (%p31) target = $region8
    $region5: #{tpu_custom_call.1} parent=1 // loop_body
      %s35 = ssub.s32 %s30, 1
      %s36 = ssub.s32 %s30, 2
      %s37 = sadd.s32 %s30, 1
      %s39 = sadd.s32 %s38, 1
      %p42 = scmp.eq.s32.totalorder %s30, 5
      %p43 = scmp.ne.s32.totalorder %s38, %s40
      %p44 = scmp.eq.s32.totalorder %s30, 0
      %p45 = por %p43, %p44
      %p46 = scmp.ne.s32.totalorder %s38, %s40
      %p47 = scmp.eq.s32.totalorder %s35, 5
      %p48 = por %p46, %p47
      %p49 = scmp.ne.s32.totalorder %s40, %s41
      %p50 = scmp.eq.s32.totalorder %s35, 0
      %p51 = por %p49, %p50
      %p52 = scmp.ne.s32.totalorder %s40, %s41
      %p53 = scmp.eq.s32.totalorder %s36, 5
      %p54 = por %p52, %p53
      %p56 = scmp.ne.s32.totalorder %s41, %s55
      %p57 = scmp.eq.s32.totalorder %s36, 0
      %p58 = por %p56, %p57
      %s60 = sadd.s32 %s59, 1
      %p63 = scmp.eq.s32.totalorder %s30, 5
      %p64 = scmp.ne.s32.totalorder %s59, %s61
      %p65 = scmp.eq.s32.totalorder %s30, 0
      %p66 = por %p64, %p65
      %p67 = scmp.ne.s32.totalorder %s59, %s61
      %p68 = scmp.eq.s32.totalorder %s35, 5
      %p69 = por %p67, %p68
      %p70 = scmp.ne.s32.totalorder %s61, %s62
      %p71 = scmp.eq.s32.totalorder %s35, 0
      %p72 = por %p70, %p71
      %p73 = scmp.ne.s32.totalorder %s61, %s62
      %p74 = scmp.eq.s32.totalorder %s36, 5
      %p75 = por %p73, %p74
      %p77 = scmp.ne.s32.totalorder %s62, %s76
      %p78 = scmp.eq.s32.totalorder %s36, 0
      %p79 = por %p77, %p78
      %s81 = sadd.s32 %s80, 1
      %p84 = scmp.eq.s32.totalorder %s30, 5
      %p85 = scmp.ne.s32.totalorder %s80, %s82
      %p86 = scmp.eq.s32.totalorder %s30, 0
      %p87 = por %p85, %p86
      %p88 = scmp.ne.s32.totalorder %s80, %s82
      %p89 = scmp.eq.s32.totalorder %s35, 5
      %p90 = por %p88, %p89
      %p91 = scmp.ne.s32.totalorder %s82, %s83
      %p92 = scmp.eq.s32.totalorder %s35, 0
      %p93 = por %p91, %p92
      %p94 = scmp.ne.s32.totalorder %s82, %s83
      %p95 = scmp.eq.s32.totalorder %s36, 5
      %p96 = por %p94, %p95
      %p98 = scmp.ne.s32.totalorder %s83, %s97
      %p99 = scmp.eq.s32.totalorder %s36, 0
      %p100 = por %p98, %p99
      %s102 = sadd.s32 %s101, 1
      %p105 = scmp.eq.s32.totalorder %s30, 5
      %p106 = scmp.ne.s32.totalorder %s101, %s103
      %p107 = scmp.eq.s32.totalorder %s30, 0
      %p108 = por %p106, %p107
      %p109 = scmp.ne.s32.totalorder %s101, %s103
      %p110 = scmp.eq.s32.totalorder %s35, 5
      %p111 = por %p109, %p110
      %p112 = scmp.ne.s32.totalorder %s103, %s104
      %p113 = scmp.eq.s32.totalorder %s35, 0
      %p114 = por %p112, %p113
      %p115 = scmp.ne.s32.totalorder %s103, %s104
      %p116 = scmp.eq.s32.totalorder %s36, 5
      %p117 = por %p115, %p116
      %p119 = scmp.ne.s32.totalorder %s104, %s118
      %p120 = scmp.eq.s32.totalorder %s36, 0
      %p121 = por %p119, %p120
      %s123 = sadd.s32 %s122, 1
      %p126 = scmp.eq.s32.totalorder %s30, 5
      %p127 = scmp.ne.s32.totalorder %s122, %s124
      %p128 = scmp.eq.s32.totalorder %s30, 0
      %p129 = por %p127, %p128
      %p130 = scmp.ne.s32.totalorder %s122, %s124
      %p131 = scmp.eq.s32.totalorder %s35, 5
      %p132 = por %p130, %p131
      %p133 = scmp.ne.s32.totalorder %s124, %s125
      %p134 = scmp.eq.s32.totalorder %s35, 0
      %p135 = por %p133, %p134
      %p136 = scmp.ne.s32.totalorder %s124, %s125
      %p137 = scmp.eq.s32.totalorder %s36, 5
      %p138 = por %p136, %p137
      %p140 = scmp.ne.s32.totalorder %s125, %s139
      %p141 = scmp.eq.s32.totalorder %s36, 0
      %p142 = por %p140, %p141
      %s144 = sadd.s32 %s143, 1
      %p147 = scmp.eq.s32.totalorder %s30, 5
      %p148 = scmp.ne.s32.totalorder %s143, %s145
      %p149 = scmp.eq.s32.totalorder %s30, 0
      %p150 = por %p148, %p149
      %p151 = scmp.ne.s32.totalorder %s143, %s145
      %p152 = scmp.eq.s32.totalorder %s35, 5
      %p153 = por %p151, %p152
      %p154 = scmp.ne.s32.totalorder %s145, %s146
      %p155 = scmp.eq.s32.totalorder %s35, 0
      %p156 = por %p154, %p155
      %p157 = scmp.ne.s32.totalorder %s145, %s146
      %p158 = scmp.eq.s32.totalorder %s36, 5
      %p159 = por %p157, %p158
      %p161 = scmp.ne.s32.totalorder %s146, %s160
      %p162 = scmp.eq.s32.totalorder %s36, 0
      %p163 = por %p161, %p162
      %s165 = sadd.s32 %s164, 1
      %p168 = scmp.eq.s32.totalorder %s30, 5
      %p169 = scmp.ne.s32.totalorder %s164, %s166
      %p170 = scmp.eq.s32.totalorder %s30, 0
      %p171 = por %p169, %p170
      %p172 = scmp.ne.s32.totalorder %s164, %s166
      %p173 = scmp.eq.s32.totalorder %s35, 5
      %p174 = por %p172, %p173
      %p175 = scmp.ne.s32.totalorder %s166, %s167
      %p176 = scmp.eq.s32.totalorder %s35, 0
      %p177 = por %p175, %p176
      %p178 = scmp.ne.s32.totalorder %s166, %s167
      %p179 = scmp.eq.s32.totalorder %s36, 5
      %p180 = por %p178, %p179
      %p182 = scmp.ne.s32.totalorder %s167, %s181
      %p183 = scmp.eq.s32.totalorder %s36, 0
      %p184 = por %p182, %p183
      %s186 = sadd.s32 %s185, 1
      %p189 = scmp.eq.s32.totalorder %s30, 5
      %p190 = scmp.ne.s32.totalorder %s185, %s187
      %p191 = scmp.eq.s32.totalorder %s30, 0
      %p192 = por %p190, %p191
      %p193 = scmp.ne.s32.totalorder %s185, %s187
      %p194 = scmp.eq.s32.totalorder %s35, 5
      %p195 = por %p193, %p194
      %p196 = scmp.ne.s32.totalorder %s187, %s188
      %p197 = scmp.eq.s32.totalorder %s35, 0
      %p198 = por %p196, %p197
      %p199 = scmp.ne.s32.totalorder %s187, %s188
      %p200 = scmp.eq.s32.totalorder %s36, 5
      %p201 = por %p199, %p200
      %p203 = scmp.ne.s32.totalorder %s188, %s202
      %p204 = scmp.eq.s32.totalorder %s36, 0
      %p205 = por %p203, %p204
      %s207 = sadd.s32 %s206, 1
      %p210 = scmp.eq.s32.totalorder %s30, 5
      %p211 = scmp.ne.s32.totalorder %s206, %s208
      %p212 = scmp.eq.s32.totalorder %s30, 0
      %p213 = por %p211, %p212
      %p214 = scmp.ne.s32.totalorder %s206, %s208
      %p215 = scmp.eq.s32.totalorder %s35, 5
      %p216 = por %p214, %p215
      %p217 = scmp.ne.s32.totalorder %s208, %s209
      %p218 = scmp.eq.s32.totalorder %s35, 0
      %p219 = por %p217, %p218
      %p220 = scmp.ne.s32.totalorder %s208, %s209
      %p221 = scmp.eq.s32.totalorder %s36, 5
      %p222 = por %p220, %p221
      %p224 = scmp.ne.s32.totalorder %s209, %s223
      %p225 = scmp.eq.s32.totalorder %s36, 0
      %p226 = por %p224, %p225
      %s228 = sadd.s32 %s227, 1
      %p231 = scmp.eq.s32.totalorder %s30, 5
      %p232 = scmp.ne.s32.totalorder %s227, %s229
      %p233 = scmp.eq.s32.totalorder %s30, 0
      %p234 = por %p232, %p233
      %p235 = scmp.ne.s32.totalorder %s227, %s229
      %p236 = scmp.eq.s32.totalorder %s35, 5
      %p237 = por %p235, %p236
      %p238 = scmp.ne.s32.totalorder %s229, %s230
      %p239 = scmp.eq.s32.totalorder %s35, 0
      %p240 = por %p238, %p239
      %p241 = scmp.ne.s32.totalorder %s229, %s230
      %p242 = scmp.eq.s32.totalorder %s36, 5
      %p243 = por %p241, %p242
      %p245 = scmp.ne.s32.totalorder %s230, %s244
      %p246 = scmp.eq.s32.totalorder %s36, 0
      %p247 = por %p245, %p246
      %s249 = sadd.s32 %s248, 1
      %p252 = scmp.eq.s32.totalorder %s30, 5
      %p253 = scmp.ne.s32.totalorder %s248, %s250
      %p254 = scmp.eq.s32.totalorder %s30, 0
      %p255 = por %p253, %p254
      %p256 = scmp.ne.s32.totalorder %s248, %s250
      %p257 = scmp.eq.s32.totalorder %s35, 5
      %p258 = por %p256, %p257
      %p259 = scmp.ne.s32.totalorder %s250, %s251
      %p260 = scmp.eq.s32.totalorder %s35, 0
      %p261 = por %p259, %p260
      %p262 = scmp.ne.s32.totalorder %s250, %s251
      %p263 = scmp.eq.s32.totalorder %s36, 5
      %p264 = por %p262, %p263
      %p266 = scmp.ne.s32.totalorder %s251, %s265
      %p267 = scmp.eq.s32.totalorder %s36, 0
      %p268 = por %p266, %p267
      %s270 = sadd.s32 %s269, 1
      %p273 = scmp.eq.s32.totalorder %s30, 5
      %p274 = scmp.ne.s32.totalorder %s269, %s271
      %p275 = scmp.eq.s32.totalorder %s30, 0
      %p276 = por %p274, %p275
      %p277 = scmp.ne.s32.totalorder %s269, %s271
      %p278 = scmp.eq.s32.totalorder %s35, 5
      %p279 = por %p277, %p278
      %p280 = scmp.ne.s32.totalorder %s271, %s272
      %p281 = scmp.eq.s32.totalorder %s35, 0
      %p282 = por %p280, %p281
      %p283 = scmp.ne.s32.totalorder %s271, %s272
      %p284 = scmp.eq.s32.totalorder %s36, 5
      %p285 = por %p283, %p284
      %p287 = scmp.ne.s32.totalorder %s272, %s286
      %p288 = scmp.eq.s32.totalorder %s36, 0
      %p289 = por %p287, %p288
      %p290 = scmp.le.s32.totalorder 1, %s30
      %p291 = scmp.lt.s32.totalorder %s30, 7
      %p292 = pnand %p290, %p291
      %p293 = pneg %p292
      // Predicated region
      $region9: #{tpu_custom_call.1} parent=5 // pred_check
        _
      $region10: #{tpu_custom_call.1} parent=5 // pred_check_branch
        %295 = sbr.rel (%p292) target = $region12
      $region11: #{tpu_custom_call.1} parent=5 // pred_region
        %s296 = ssub.s32 %s30, 1
        // Predicated region
        $region13: #{tpu_custom_call.1} parent=11 // pred_check
          %p297 = pneg %p51
        $region14: #{tpu_custom_call.1} parent=11 // pred_check_branch
          %299 = sbr.rel (%p297) target = $region16
        $region15: #{tpu_custom_call.1} parent=11 // pred_region
          %s301 = ssub.s32 320, 320
          %302 = vsyncadd [#allocation6], %s301
          %s303 = sshll.u32 [#allocation5], 4
          %s304 = int_to_ptr.vmem [resolvable:$true] %s303
          %309 = dma.hbm_to_vmem [thread:$0]  %s1, 320, %s304, [#allocation6], 16, 16, 1
        $region16: #{tpu_custom_call.1} parent=11 // pred_fallthru
          _
        // Predicated region
        $region17: #{tpu_custom_call.1} parent=11 // pred_check
          %p310 = pneg %p72
        $region18: #{tpu_custom_call.1} parent=11 // pred_check_branch
          %312 = sbr.rel (%p310) target = $region20
        $region19: #{tpu_custom_call.1} parent=11 // pred_region
          %s314 = ssub.s32 128, 128
          %315 = vsyncadd [#allocation9], %s314
          %s317 = sshll.u32 [#allocation8], 4
          %s318 = int_to_ptr.vmem [resolvable:$true] %s317
          %320 = dma.hbm_to_vmem [thread:$0]  %s2, 128, %s318, [#allocation9]
        $region20: #{tpu_custom_call.1} parent=11 // pred_fallthru
          _
        // Predicated region
        $region21: #{tpu_custom_call.1} parent=11 // pred_check
          %p321 = pneg %p93
        $region22: #{tpu_custom_call.1} parent=11 // pred_check_branch
          %323 = sbr.rel (%p321) target = $region24
        $region23: #{tpu_custom_call.1} parent=11 // pred_region
          %s325 = ssub.s32 128, 128
          %326 = vsyncadd [#allocation9], %s325
          %s328 = sshll.u32 [#allocation10], 4
          %s329 = int_to_ptr.vmem [resolvable:$true] %s328
          %331 = dma.hbm_to_vmem [thread:$0]  %s3, 128, %s329, [#allocation9]
        $region24: #{tpu_custom_call.1} parent=11 // pred_fallthru
          _
        // Predicated region
        $region25: #{tpu_custom_call.1} parent=11 // pred_check
          %p332 = pneg %p114
        $region26: #{tpu_custom_call.1} parent=11 // pred_check_branch
          %334 = sbr.rel (%p332) target = $region28
        $region27: #{tpu_custom_call.1} parent=11 // pred_region
          %s336 = ssub.s32 16, 16
          %337 = vsyncadd [#allocation12], %s336
          %s339 = sshll.u32 [#allocation11], 4
          %s340 = int_to_ptr.vmem [resolvable:$true] %s339
          %342 = dma.hbm_to_vmem [thread:$0]  %s4, 16, %s340, [#allocation12]
        $region28: #{tpu_custom_call.1} parent=11 // pred_fallthru
          _
        // Predicated region
        $region29: #{tpu_custom_call.1} parent=11 // pred_check
          %p343 = pneg %p135
        $region30: #{tpu_custom_call.1} parent=11 // pred_check_branch
          %345 = sbr.rel (%p343) target = $region32
        $region31: #{tpu_custom_call.1} parent=11 // pred_region
          %s347 = ssub.s32 2048, 2048
          %348 = vsyncadd [#allocation12], %s347
          %s349 = sshll.u32 [#allocation13], 4
          %s350 = int_to_ptr.vmem [resolvable:$true] %s349
          %355 = dma.hbm_to_vmem [thread:$0]  %s5, 2048, %s350, [#allocation12], 256, 256, 16
        $region32: #{tpu_custom_call.1} parent=11 // pred_fallthru
          _
        // Predicated region
        $region33: #{tpu_custom_call.1} parent=11 // pred_check
          %p356 = pneg %p156
        $region34: #{tpu_custom_call.1} parent=11 // pred_check_branch
          %358 = sbr.rel (%p356) target = $region36
        $region35: #{tpu_custom_call.1} parent=11 // pred_region
          %s360 = ssub.s32 512, 512
          %361 = vsyncadd [#allocation15], %s360
          %s362 = sshll.u32 [#allocation14], 4
          %s363 = int_to_ptr.vmem [resolvable:$true] %s362
          %368 = dma.hbm_to_vmem [thread:$0]  %s6, 512, %s363, [#allocation15], 128, 128, 8
        $region36: #{tpu_custom_call.1} parent=11 // pred_fallthru
          _
        // Predicated region
        $region37: #{tpu_custom_call.1} parent=11 // pred_check
          %p369 = pneg %p177
        $region38: #{tpu_custom_call.1} parent=11 // pred_check_branch
          %371 = sbr.rel (%p369) target = $region40
        $region39: #{tpu_custom_call.1} parent=11 // pred_region
          %s373 = ssub.s32 512, 512
          %374 = vsyncadd [#allocation15], %s373
          %s375 = sshll.u32 [#allocation16], 4
          %s376 = int_to_ptr.vmem [resolvable:$true] %s375
          %381 = dma.hbm_to_vmem [thread:$0]  %s7, 512, %s376, [#allocation15], 128, 128, 8
        $region40: #{tpu_custom_call.1} parent=11 // pred_fallthru
          _
        // Predicated region
        $region41: #{tpu_custom_call.1} parent=11 // pred_check
          %p382 = pneg %p198
        $region42: #{tpu_custom_call.1} parent=11 // pred_check_branch
          %384 = sbr.rel (%p382) target = $region44
        $region43: #{tpu_custom_call.1} parent=11 // pred_region
          %s386 = ssub.s32 1024, 1024
          %387 = vsyncadd [#allocation18], %s386
          %s388 = sshll.u32 [#allocation17], 4
          %s389 = int_to_ptr.vmem [resolvable:$true] %s388
          %394 = dma.hbm_to_vmem [thread:$0]  %s8, 1024, %s389, [#allocation18], 128, 128, 8
        $region44: #{tpu_custom_call.1} parent=11 // pred_fallthru
          _
        // Predicated region
        $region45: #{tpu_custom_call.1} parent=11 // pred_check
          %p395 = pneg %p219
        $region46: #{tpu_custom_call.1} parent=11 // pred_check_branch
          %397 = sbr.rel (%p395) target = $region48
        $region47: #{tpu_custom_call.1} parent=11 // pred_region
          _
        $region48: #{tpu_custom_call.1} parent=11 // pred_fallthru
          _
      $region12: #{tpu_custom_call.1} parent=5 // pred_fallthru
        _
      %p398 = scmp.lt.s32.totalorder %s30, 6
      // Predicated region
      $region49: #{tpu_custom_call.1} parent=5 // pred_check
        %p399 = pneg %p398
      $region50: #{tpu_custom_call.1} parent=5 // pred_check_branch
        %401 = sbr.rel (%p399) target = $region52
      $region51: #{tpu_custom_call.1} parent=5 // pred_region
        _
      $region52: #{tpu_custom_call.1} parent=5 // pred_fallthru
        _
      %p402 = scmp.le.s32.totalorder 1, %s30
      %p403 = scmp.lt.s32.totalorder %s30, 7
      %p404 = pnand %p402, %p403
      %p405 = pneg %p404
      // Predicated region
      $region53: #{tpu_custom_call.1} parent=5 // pred_check
        _
      $region54: #{tpu_custom_call.1} parent=5 // pred_check_branch
        %407 = sbr.rel (%p404) target = $region56
      $region55: #{tpu_custom_call.1} parent=5 // pred_region
        %s408 = ssub.s32 %s30, 1
        // Predicated region
        $region57: #{tpu_custom_call.1} parent=55 // pred_check
          %p409 = pneg %p51
        $region58: #{tpu_custom_call.1} parent=55 // pred_check_branch
          %411 = sbr.rel (%p409) target = $region60
        $region59: #{tpu_custom_call.1} parent=55 // pred_region
          %412 = dma.done [#allocation6], 320
        $region60: #{tpu_custom_call.1} parent=55 // pred_fallthru
          _
        // Predicated region
        $region61: #{tpu_custom_call.1} parent=55 // pred_check
          %p413 = pneg %p72
        $region62: #{tpu_custom_call.1} parent=55 // pred_check_branch
          %415 = sbr.rel (%p413) target = $region64
        $region63: #{tpu_custom_call.1} parent=55 // pred_region
          %416 = dma.done [#allocation9], 128
        $region64: #{tpu_custom_call.1} parent=55 // pred_fallthru
          _
        // Predicated region
        $region65: #{tpu_custom_call.1} parent=55 // pred_check
          %p417 = pneg %p93
        $region66: #{tpu_custom_call.1} parent=55 // pred_check_branch
          %419 = sbr.rel (%p417) target = $region68
        $region67: #{tpu_custom_call.1} parent=55 // pred_region
          %420 = dma.done [#allocation9], 128
        $region68: #{tpu_custom_call.1} parent=55 // pred_fallthru
          _
        // Predicated region
        $region69: #{tpu_custom_call.1} parent=55 // pred_check
          %p421 = pneg %p114
        $region70: #{tpu_custom_call.1} parent=55 // pred_check_branch
          %423 = sbr.rel (%p421) target = $region72
        $region71: #{tpu_custom_call.1} parent=55 // pred_region
          %424 = dma.done [#allocation12], 16
        $region72: #{tpu_custom_call.1} parent=55 // pred_fallthru
          _
        // Predicated region
        $region73: #{tpu_custom_call.1} parent=55 // pred_check
          %p425 = pneg %p135
        $region74: #{tpu_custom_call.1} parent=55 // pred_check_branch
          %427 = sbr.rel (%p425) target = $region76
        $region75: #{tpu_custom_call.1} parent=55 // pred_region
          %428 = dma.done [#allocation12], 2048
        $region76: #{tpu_custom_call.1} parent=55 // pred_fallthru
          _
        // Predicated region
        $region77: #{tpu_custom_call.1} parent=55 // pred_check
          %p429 = pneg %p156
        $region78: #{tpu_custom_call.1} parent=55 // pred_check_branch
          %431 = sbr.rel (%p429) target = $region80
        $region79: #{tpu_custom_call.1} parent=55 // pred_region
          %432 = dma.done [#allocation15], 512
        $region80: #{tpu_custom_call.1} parent=55 // pred_fallthru
          _
        // Predicated region
        $region81: #{tpu_custom_call.1} parent=55 // pred_check
          %p433 = pneg %p177
        $region82: #{tpu_custom_call.1} parent=55 // pred_check_branch
          %435 = sbr.rel (%p433) target = $region84
        $region83: #{tpu_custom_call.1} parent=55 // pred_region
          %436 = dma.done [#allocation15], 512
        $region84: #{tpu_custom_call.1} parent=55 // pred_fallthru
          _
        // Predicated region
        $region85: #{tpu_custom_call.1} parent=55 // pred_check
          %p437 = pneg %p198
        $region86: #{tpu_custom_call.1} parent=55 // pred_check_branch
          %439 = sbr.rel (%p437) target = $region88
        $region87: #{tpu_custom_call.1} parent=55 // pred_region
          %440 = dma.done [#allocation18], 1024
        $region88: #{tpu_custom_call.1} parent=55 // pred_fallthru
          _
        %p441 = pneg %p51
        %p442 = pneg %p48
        %p443 = pneg %p72
        %p444 = pneg %p69
        %p445 = pneg %p93
        %p446 = pneg %p90
        %p447 = pneg %p114
        %p448 = pneg %p111
        %p449 = pneg %p135
        %p450 = pneg %p132
        %p451 = pneg %p156
        %p452 = pneg %p153
        %p453 = pneg %p177
        %p454 = pneg %p174
        %p455 = pneg %p198
        %p456 = pneg %p195
        %p457 = pneg %p219
        %p458 = pneg %p216
        %p459 = pneg %p240
        %p460 = pneg %p237
        %p461 = pneg %p261
        %p462 = pneg %p258
        %p463 = pneg %p282
        %p464 = pneg %p279
        %p465 = scmp.eq.s32.totalorder %s35, 0
        // Predicated region
        $region89: #{tpu_custom_call.1} parent=55 // pred_check
          %p466 = pneg %p465
        $region90: #{tpu_custom_call.1} parent=55 // pred_check_branch
          %468 = sbr.rel (%p466) target = $region92
        $region91: #{tpu_custom_call.1} parent=55 // pred_region
          %v469 = vld [vmem:[#allocation11] sm:$0x1]
          %vm470 = vcmask 253952
          %471 = vst.msk [vmem:[#allocation2] sm:$0x1] %vm470, %v469
        $region92: #{tpu_custom_call.1} parent=55 // pred_fallthru
          _
        %v472 = vld [vmem:[#allocation2] sm:$0x1]
        %s473 = sld [smem:[#allocation4 + %s35]]
        %s474 = scalar_lea.vmem [#allocation5], %s473
        %v475 = vld [vmem:[%s474] sm:$0x1]
        %v477 = vlaneseq
        %v478 = vshrl.u32 %v477, 7
        %v479 = vsub.s32 0, %v478
        %v480 = vrot.slane %v475, %v479
        %481 = vrot.lane.b32.xlu0 %v480, 32
        %v482 = vpop.permute.xlu0 %481
        %vm484 = vcmask 261120
        %v485 = vsel %vm484, %v472, %v482
        %v486 = vld [vmem:[#allocation13] sm:$0xff]
        %v487 = vld [vmem:[#allocation13 + $0x8] sm:$0xff]
        %v488 = vld [vmem:[#allocation13 + $0x10] sm:$0xff]
        %v489 = vld [vmem:[#allocation13 + $0x18] sm:$0xff]
        %v490 = vld [vmem:[#allocation13 + $0x20] sm:$0xff]
        %v491 = vld [vmem:[#allocation13 + $0x28] sm:$0xff]
        %v492 = vld [vmem:[#allocation13 + $0x30] sm:$0xff]
        %v493 = vld [vmem:[#allocation13 + $0x38] sm:$0xff]
        %v494 = vld [vmem:[#allocation13 + $0x40] sm:$0xff]
        %v495 = vld [vmem:[#allocation13 + $0x48] sm:$0xff]
        %v496 = vld [vmem:[#allocation13 + $0x50] sm:$0xff]
        %v497 = vld [vmem:[#allocation13 + $0x58] sm:$0xff]
        %v498 = vld [vmem:[#allocation13 + $0x60] sm:$0xff]
        %v499 = vld [vmem:[#allocation13 + $0x68] sm:$0xff]
        %v500 = vld [vmem:[#allocation13 + $0x70] sm:$0xff]
        %v501 = vld [vmem:[#allocation13 + $0x78] sm:$0xff]
        %v502 = vld [vmem:[%s9] ss:$8 sm:$0x3]
        %v504 = vlaneseq
        %v505 = vshrl.u32 %v504, 7
        %v506 = vsub.s32 0, %v505
        %v507 = vrot.slane %v502, %v506
        %v508 = vlaneseq
        %v509 = vshrl.u32 %v508, 7
        %v510 = vsub.s32 1, %v509
        %v511 = vrot.slane %v502, %v510
        %vm514 = vcmask 523264
        %v516 = vsel %vm514, %v485, 0
        %518 = vmatprep.subr.mxu0 0.0
        %519 = vmatpush1.msra.mxu0 0.0
        %520 = vmatprep.subr.mxu0 0.0
        %521 = vmatpush1.msra.mxu0 0.0
        %522 = vmatprep.subr.mxu0 0.0
        %523 = vmatpush1.msra.mxu0 0.0
        %524 = vmatprep.subr.mxu0 0.0
        %525 = vmatpush1.msra.mxu0 0.0
        %526 = vmatprep.subr.mxu0 0.0
        %527 = vmatpush1.msra.mxu0 0.0
        %528 = vmatprep.subr.mxu0 0.0
        %529 = vmatpush1.msra.mxu0 0.0
        %530 = vmatprep.subr.mxu0 0.0
        %531 = vmatpush1.msra.mxu0 0.0
        %532 = vmatprep.subr.mxu0 0.0
        %533 = vmatpush1.msra.mxu0 0.0
        %534 = vmatprep.subr.mxu0 %v501
        %535 = vmatpush1.msra.mxu0 %v500
        %536 = vmatprep.subr.mxu0 %v499
        %537 = vmatpush1.msra.mxu0 %v498
        %538 = vmatprep.subr.mxu0 %v497
        %539 = vmatpush1.msra.mxu0 %v496
        %540 = vmatprep.subr.mxu0 %v495
        %541 = vmatpush1.msra.mxu0 %v494
        %542 = vmatprep.subr.mxu0 %v493
        %543 = vmatpush1.msra.mxu0 %v492
        %544 = vmatprep.subr.mxu0 %v491
        %545 = vmatpush1.msra.mxu0 %v490
        %546 = vmatprep.subr.mxu0 %v489
        %547 = vmatpush1.msra.mxu0 %v488
        %548 = vmatprep.subr.mxu0 %v487
        %549 = vmatpush1.msra.mxu0 %v486
        %550 = vmatprep.subr.mxu0 0.0
        %551 = vmatpush2.msra.mxu0 0.0
        %552 = vmatprep.subr.mxu0 0.0
        %553 = vmatpush2.msra.mxu0 0.0
        %554 = vmatprep.subr.mxu0 0.0
        %555 = vmatpush2.msra.mxu0 0.0
        %556 = vmatprep.subr.mxu0 0.0
        %557 = vmatpush2.msra.mxu0 0.0
        %558 = vmatprep.subr.mxu0 0.0
        %559 = vmatpush2.msra.mxu0 0.0
        %560 = vmatprep.subr.mxu0 0.0
        %561 = vmatpush2.msra.mxu0 0.0
        %562 = vmatprep.subr.mxu0 0.0
        %563 = vmatpush2.msra.mxu0 0.0
        %564 = vmatprep.subr.mxu0 0.0
        %565 = vmatpush2.msra.mxu0 0.0
        %566 = vmatprep.subr.mxu0 0.0
        %567 = vmatpush2.msra.mxu0 0.0
        %568 = vmatprep.subr.mxu0 0.0
        %569 = vmatpush2.msra.mxu0 0.0
        %570 = vmatprep.subr.mxu0 0.0
        %571 = vmatpush2.msra.mxu0 0.0
        %572 = vmatprep.subr.mxu0 0.0
        %573 = vmatpush2.msra.mxu0 0.0
        %574 = vmatprep.subr.mxu0 0.0
        %575 = vmatpush2.msra.mxu0 0.0
        %576 = vmatprep.subr.mxu0 0.0
        %577 = vmatpush2.msra.mxu0 0.0
        %578 = vmatprep.subr.mxu0 0.0
        %579 = vmatpush2.msra.mxu0 0.0
        %580 = vmatprep.subr.mxu0 0.0
        %581 = vmatpush2.msra.mxu0 0.0
        %582 = vmatprep.mubr.f32.mxu0 0.0
        %583 = vmatmul.mubr.f32.gmra.mxu0 %v516
        %v584 = vpop.f32.mrf.mxu0
        %v585 = vadd.f32 %v507, %v584
        %v586 = vpop.f32.mrf.mxu0
        %v587 = vadd.f32 %v511, %v586
        %588 = vdwg.mxu0
        %v589 = vld [vmem:[%s9 + $0x4] ss:$0 sm:$0xff]
        %v590 = vld [vmem:[#allocation8] sm:$0xff]
        %v591 = vlaneseq
        %v592 = vshrl.u32 %v591, 7
        %v593 = vsub.s32 0, %v592
        %v594 = vrot.slane %v585, %v593
        %v595 = vadd.f32 %v590, %v594
        %v596 = vtanh.pop %v595
        %v598 = vsel %vm484, %v589, 0
        %v601 = vsel %vm484, %v596, 0
        %603 = vmatprep.subr.mxu0 0.0
        %604 = vmatpush1.xpose.msra.mxu0 0.0
        %605 = vmatprep.subr.mxu0 0.0
        %606 = vmatpush1.xpose.msra.mxu0 0.0
        %607 = vmatprep.subr.mxu0 0.0
        %608 = vmatpush1.xpose.msra.mxu0 0.0
        %609 = vmatprep.subr.mxu0 0.0
        %610 = vmatpush1.xpose.msra.mxu0 0.0
        %611 = vmatprep.subr.mxu0 0.0
        %612 = vmatpush1.xpose.msra.mxu0 0.0
        %613 = vmatprep.subr.mxu0 0.0
        %614 = vmatpush1.xpose.msra.mxu0 0.0
        %615 = vmatprep.subr.mxu0 0.0
        %616 = vmatpush1.xpose.msra.mxu0 0.0
        %617 = vmatprep.subr.mxu0 0.0
        %618 = vmatpush1.xpose.msra.mxu0 0.0
        %619 = vmatprep.subr.mxu0 0.0
        %620 = vmatpush1.xpose.msra.mxu0 0.0
        %621 = vmatprep.subr.mxu0 0.0
        %622 = vmatpush1.xpose.msra.mxu0 0.0
        %623 = vmatprep.subr.mxu0 0.0
        %624 = vmatpush1.xpose.msra.mxu0 0.0
        %625 = vmatprep.subr.mxu0 0.0
        %626 = vmatpush1.xpose.msra.mxu0 0.0
        %627 = vmatprep.subr.mxu0 0.0
        %628 = vmatpush1.xpose.msra.mxu0 0.0
        %629 = vmatprep.subr.mxu0 0.0
        %630 = vmatpush1.xpose.msra.mxu0 0.0
        %631 = vmatprep.subr.mxu0 0.0
        %632 = vmatpush1.xpose.msra.mxu0 0.0
        %633 = vmatprep.subr.mxu0 0.0
        %634 = vmatpush1.xpose.msra.mxu0 %v601
        %635 = vmatprep.subr.mxu0 0.0
        %636 = vmatpush2.xpose.msra.mxu0 0.0
        %637 = vmatprep.subr.mxu0 0.0
        %638 = vmatpush2.xpose.msra.mxu0 0.0
        %639 = vmatprep.subr.mxu0 0.0
        %640 = vmatpush2.xpose.msra.mxu0 0.0
        %641 = vmatprep.subr.mxu0 0.0
        %642 = vmatpush2.xpose.msra.mxu0 0.0
        %643 = vmatprep.subr.mxu0 0.0
        %644 = vmatpush2.xpose.msra.mxu0 0.0
        %645 = vmatprep.subr.mxu0 0.0
        %646 = vmatpush2.xpose.msra.mxu0 0.0
        %647 = vmatprep.subr.mxu0 0.0
        %648 = vmatpush2.xpose.msra.mxu0 0.0
        %649 = vmatprep.subr.mxu0 0.0
        %650 = vmatpush2.xpose.msra.mxu0 0.0
        %651 = vmatprep.subr.mxu0 0.0
        %652 = vmatpush2.xpose.msra.mxu0 0.0
        %653 = vmatprep.subr.mxu0 0.0
        %654 = vmatpush2.xpose.msra.mxu0 0.0
        %655 = vmatprep.subr.mxu0 0.0
        %656 = vmatpush2.xpose.msra.mxu0 0.0
        %657 = vmatprep.subr.mxu0 0.0
        %658 = vmatpush2.xpose.msra.mxu0 0.0
        %659 = vmatprep.subr.mxu0 0.0
        %660 = vmatpush2.xpose.msra.mxu0 0.0
        %661 = vmatprep.subr.mxu0 0.0
        %662 = vmatpush2.xpose.msra.mxu0 0.0
        %663 = vmatprep.subr.mxu0 0.0
        %664 = vmatpush2.xpose.msra.mxu0 0.0
        %665 = vmatprep.subr.mxu0 0.0
        %666 = vmatpush2.xpose.msra.mxu0 0.0
        %667 = vmatprep.mubr.f32.mxu0 0.0
        %668 = vmatmul.mubr.f32.gmra.mxu0 %v598
        %v669 = vpop.f32.mrf.mxu0
        %v670 = vadd.f32 0.0, %v669
        %v671 = vpop.f32.mrf.mxu0
        %672 = vdwg.mxu0
        %vm673 = vcmask 57344
        %v674 = vsel %vm673, %v670, -inf
        %675 = vmax.xlane.f32.xlu0 %v674
        %v676 = vpop.xlane.xlu0 %675
        %v677 = vsub.f32 %v670, %v676
        %v678 = vmul.f32 %v677, 1.442695
        %v679 = vpow.pop %v678
        %v680 = vsel %vm673, %v679, 0.0
        %681 = vadd.xlane.f32.xlu0 %v680
        %v682 = vpop.xlane.xlu0 %681
        %v683 = vrcp.pop %v682
        %v684 = vmul.f32 %v679, %v683
        %s685 = scalar_lea.vmem [#allocation22], %s35
        %686 = vst.msk [vmem:[%s685] sm:$0x1] %vm673, %v684
        %v687 = vld [vmem:[#allocation10] sm:$0xff]
        %vm688 = vcmask 64512
        %v690 = vsel %vm688, %v684, 0
        %692 = vmatprep.subr.mxu0 0.0
        %693 = vmatpush1.msra.mxu0 0.0
        %694 = vmatprep.subr.mxu0 0.0
        %695 = vmatpush1.msra.mxu0 0.0
        %696 = vmatprep.subr.mxu0 0.0
        %697 = vmatpush1.msra.mxu0 0.0
        %698 = vmatprep.subr.mxu0 0.0
        %699 = vmatpush1.msra.mxu0 0.0
        %700 = vmatprep.subr.mxu0 0.0
        %701 = vmatpush1.msra.mxu0 0.0
        %702 = vmatprep.subr.mxu0 0.0
        %703 = vmatpush1.msra.mxu0 0.0
        %704 = vmatprep.subr.mxu0 0.0
        %705 = vmatpush1.msra.mxu0 0.0
        %706 = vmatprep.subr.mxu0 0.0
        %707 = vmatpush1.msra.mxu0 0.0
        %708 = vmatprep.subr.mxu0 0.0
        %709 = vmatpush1.msra.mxu0 0.0
        %710 = vmatprep.subr.mxu0 0.0
        %711 = vmatpush1.msra.mxu0 0.0
        %712 = vmatprep.subr.mxu0 0.0
        %713 = vmatpush1.msra.mxu0 0.0
        %714 = vmatprep.subr.mxu0 0.0
        %715 = vmatpush1.msra.mxu0 0.0
        %716 = vmatprep.subr.mxu0 0.0
        %717 = vmatpush1.msra.mxu0 0.0
        %718 = vmatprep.subr.mxu0 0.0
        %719 = vmatpush1.msra.mxu0 0.0
        %720 = vmatprep.subr.mxu0 0.0
        %721 = vmatpush1.msra.mxu0 0.0
        %722 = vmatprep.subr.mxu0 0.0
        %723 = vmatpush1.msra.mxu0 %v687
        %724 = vmatprep.subr.mxu0 0.0
        %725 = vmatpush2.msra.mxu0 0.0
        %726 = vmatprep.subr.mxu0 0.0
        %727 = vmatpush2.msra.mxu0 0.0
        %728 = vmatprep.subr.mxu0 0.0
        %729 = vmatpush2.msra.mxu0 0.0
        %730 = vmatprep.subr.mxu0 0.0
        %731 = vmatpush2.msra.mxu0 0.0
        %732 = vmatprep.subr.mxu0 0.0
        %733 = vmatpush2.msra.mxu0 0.0
        %734 = vmatprep.subr.mxu0 0.0
        %735 = vmatpush2.msra.mxu0 0.0
        %736 = vmatprep.subr.mxu0 0.0
        %737 = vmatpush2.msra.mxu0 0.0
        %738 = vmatprep.subr.mxu0 0.0
        %739 = vmatpush2.msra.mxu0 0.0
        %740 = vmatprep.subr.mxu0 0.0
        %741 = vmatpush2.msra.mxu0 0.0
        %742 = vmatprep.subr.mxu0 0.0
        %743 = vmatpush2.msra.mxu0 0.0
        %744 = vmatprep.subr.mxu0 0.0
        %745 = vmatpush2.msra.mxu0 0.0
        %746 = vmatprep.subr.mxu0 0.0
        %747 = vmatpush2.msra.mxu0 0.0
        %748 = vmatprep.subr.mxu0 0.0
        %749 = vmatpush2.msra.mxu0 0.0
        %750 = vmatprep.subr.mxu0 0.0
        %751 = vmatpush2.msra.mxu0 0.0
        %752 = vmatprep.subr.mxu0 0.0
        %753 = vmatpush2.msra.mxu0 0.0
        %754 = vmatprep.subr.mxu0 0.0
        %755 = vmatpush2.msra.mxu0 0.0
        %756 = vmatprep.mubr.f32.mxu0 0.0
        %757 = vmatmul.mubr.f32.gmra.mxu0 %v690
        %v758 = vpop.f32.mrf.mxu0
        %v759 = vadd.f32 0.0, %v758
        %v760 = vpop.f32.mrf.mxu0
        %761 = vdwg.mxu0
        %v762 = vld [vmem:[#allocation14] sm:$0xff]
        %v763 = vld [vmem:[#allocation14 + $0x8] sm:$0xff]
        %v764 = vld [vmem:[#allocation14 + $0x10] sm:$0xff]
        %v765 = vld [vmem:[#allocation14 + $0x18] sm:$0xff]
        %v767 = vsel %vm484, %v759, 0
        %769 = vmatprep.subr.mxu0 0.0
        %770 = vmatpush1.msra.mxu0 0.0
        %771 = vmatprep.subr.mxu0 0.0
        %772 = vmatpush1.msra.mxu0 0.0
        %773 = vmatprep.subr.mxu0 0.0
        %774 = vmatpush1.msra.mxu0 0.0
        %775 = vmatprep.subr.mxu0 0.0
        %776 = vmatpush1.msra.mxu0 0.0
        %777 = vmatprep.subr.mxu0 0.0
        %778 = vmatpush1.msra.mxu0 0.0
        %779 = vmatprep.subr.mxu0 0.0
        %780 = vmatpush1.msra.mxu0 0.0
        %781 = vmatprep.subr.mxu0 0.0
        %782 = vmatpush1.msra.mxu0 0.0
        %783 = vmatprep.subr.mxu0 0.0
        %784 = vmatpush1.msra.mxu0 0.0
        %785 = vmatprep.subr.mxu0 0.0
        %786 = vmatpush1.msra.mxu0 0.0
        %787 = vmatprep.subr.mxu0 0.0
        %788 = vmatpush1.msra.mxu0 0.0
        %789 = vmatprep.subr.mxu0 0.0
        %790 = vmatpush1.msra.mxu0 0.0
        %791 = vmatprep.subr.mxu0 0.0
        %792 = vmatpush1.msra.mxu0 0.0
        %793 = vmatprep.subr.mxu0 0.0
        %794 = vmatpush1.msra.mxu0 %v765
        %795 = vmatprep.subr.mxu0 0.0
        %796 = vmatpush1.msra.mxu0 %v764
        %797 = vmatprep.subr.mxu0 0.0
        %798 = vmatpush1.msra.mxu0 %v763
        %799 = vmatprep.subr.mxu0 0.0
        %800 = vmatpush1.msra.mxu0 %v762
        %801 = vmatprep.subr.mxu0 0.0
        %802 = vmatpush2.msra.mxu0 0.0
        %803 = vmatprep.subr.mxu0 0.0
        %804 = vmatpush2.msra.mxu0 0.0
        %805 = vmatprep.subr.mxu0 0.0
        %806 = vmatpush2.msra.mxu0 0.0
        %807 = vmatprep.subr.mxu0 0.0
        %808 = vmatpush2.msra.mxu0 0.0
        %809 = vmatprep.subr.mxu0 0.0
        %810 = vmatpush2.msra.mxu0 0.0
        %811 = vmatprep.subr.mxu0 0.0
        %812 = vmatpush2.msra.mxu0 0.0
        %813 = vmatprep.subr.mxu0 0.0
        %814 = vmatpush2.msra.mxu0 0.0
        %815 = vmatprep.subr.mxu0 0.0
        %816 = vmatpush2.msra.mxu0 0.0
        %817 = vmatprep.subr.mxu0 0.0
        %818 = vmatpush2.msra.mxu0 0.0
        %819 = vmatprep.subr.mxu0 0.0
        %820 = vmatpush2.msra.mxu0 0.0
        %821 = vmatprep.subr.mxu0 0.0
        %822 = vmatpush2.msra.mxu0 0.0
        %823 = vmatprep.subr.mxu0 0.0
        %824 = vmatpush2.msra.mxu0 0.0
        %825 = vmatprep.subr.mxu0 0.0
        %826 = vmatpush2.msra.mxu0 0.0
        %827 = vmatprep.subr.mxu0 0.0
        %828 = vmatpush2.msra.mxu0 0.0
        %829 = vmatprep.subr.mxu0 0.0
        %830 = vmatpush2.msra.mxu0 0.0
        %831 = vmatprep.subr.mxu0 0.0
        %832 = vmatpush2.msra.mxu0 0.0
        %833 = vmatprep.mubr.f32.mxu0 0.0
        %834 = vmatmul.mubr.f32.gmra.mxu0 %v767
        %v835 = vpop.f32.mrf.mxu0
        %v836 = vadd.f32 %v587, %v835
        %v837 = vpop.f32.mrf.mxu0
        %838 = vdwg.mxu0
        %v839 = vld [vmem:[%s9 + $0x1] ss:$0 sm:$0xff]
        %v840 = vadd.f32 %v836, %v839
        %v841 = vmax.f32 %v840, 0.0
        %v842 = vld [vmem:[#allocation16] sm:$0xff]
        %v843 = vld [vmem:[#allocation16 + $0x8] sm:$0xff]
        %v844 = vld [vmem:[#allocation16 + $0x10] sm:$0xff]
        %v845 = vld [vmem:[#allocation16 + $0x18] sm:$0xff]
        %v846 = vld [vmem:[%s9 + $0x2] ss:$0 sm:$0xff]
        %v848 = vsel %vm484, %v841, 0
        %850 = vmatprep.subr.mxu0 0.0
        %851 = vmatpush1.msra.mxu0 0.0
        %852 = vmatprep.subr.mxu0 0.0
        %853 = vmatpush1.msra.mxu0 0.0
        %854 = vmatprep.subr.mxu0 0.0
        %855 = vmatpush1.msra.mxu0 0.0
        %856 = vmatprep.subr.mxu0 0.0
        %857 = vmatpush1.msra.mxu0 0.0
        %858 = vmatprep.subr.mxu0 0.0
        %859 = vmatpush1.msra.mxu0 0.0
        %860 = vmatprep.subr.mxu0 0.0
        %861 = vmatpush1.msra.mxu0 0.0
        %862 = vmatprep.subr.mxu0 0.0
        %863 = vmatpush1.msra.mxu0 0.0
        %864 = vmatprep.subr.mxu0 0.0
        %865 = vmatpush1.msra.mxu0 0.0
        %866 = vmatprep.subr.mxu0 0.0
        %867 = vmatpush1.msra.mxu0 0.0
        %868 = vmatprep.subr.mxu0 0.0
        %869 = vmatpush1.msra.mxu0 0.0
        %870 = vmatprep.subr.mxu0 0.0
        %871 = vmatpush1.msra.mxu0 0.0
        %872 = vmatprep.subr.mxu0 0.0
        %873 = vmatpush1.msra.mxu0 0.0
        %874 = vmatprep.subr.mxu0 0.0
        %875 = vmatpush1.msra.mxu0 %v845
        %876 = vmatprep.subr.mxu0 0.0
        %877 = vmatpush1.msra.mxu0 %v844
        %878 = vmatprep.subr.mxu0 0.0
        %879 = vmatpush1.msra.mxu0 %v843
        %880 = vmatprep.subr.mxu0 0.0
        %881 = vmatpush1.msra.mxu0 %v842
        %882 = vmatprep.subr.mxu0 0.0
        %883 = vmatpush2.msra.mxu0 0.0
        %884 = vmatprep.subr.mxu0 0.0
        %885 = vmatpush2.msra.mxu0 0.0
        %886 = vmatprep.subr.mxu0 0.0
        %887 = vmatpush2.msra.mxu0 0.0
        %888 = vmatprep.subr.mxu0 0.0
        %889 = vmatpush2.msra.mxu0 0.0
        %890 = vmatprep.subr.mxu0 0.0
        %891 = vmatpush2.msra.mxu0 0.0
        %892 = vmatprep.subr.mxu0 0.0
        %893 = vmatpush2.msra.mxu0 0.0
        %894 = vmatprep.subr.mxu0 0.0
        %895 = vmatpush2.msra.mxu0 0.0
        %896 = vmatprep.subr.mxu0 0.0
        %897 = vmatpush2.msra.mxu0 0.0
        %898 = vmatprep.subr.mxu0 0.0
        %899 = vmatpush2.msra.mxu0 0.0
        %900 = vmatprep.subr.mxu0 0.0
        %901 = vmatpush2.msra.mxu0 0.0
        %902 = vmatprep.subr.mxu0 0.0
        %903 = vmatpush2.msra.mxu0 0.0
        %904 = vmatprep.subr.mxu0 0.0
        %905 = vmatpush2.msra.mxu0 0.0
        %906 = vmatprep.subr.mxu0 0.0
        %907 = vmatpush2.msra.mxu0 0.0
        %908 = vmatprep.subr.mxu0 0.0
        %909 = vmatpush2.msra.mxu0 0.0
        %910 = vmatprep.subr.mxu0 0.0
        %911 = vmatpush2.msra.mxu0 0.0
        %912 = vmatprep.subr.mxu0 0.0
        %913 = vmatpush2.msra.mxu0 0.0
        %914 = vmatprep.mubr.f32.mxu0 0.0
        %915 = vmatmul.mubr.f32.gmra.mxu0 %v848
        %v916 = vpop.f32.mrf.mxu0
        %v917 = vadd.f32 %v846, %v916
        %v918 = vpop.f32.mrf.mxu0
        %919 = vdwg.mxu0
        %921 = vrot.lane.b32.xlu0 %v585, 96
        %v922 = vpop.permute.xlu0 %921
        %v924 = vadd.f32 %v917, %v922
        %v925 = vxor.u32 %v924, 2147483648
        %v926 = vmul.f32 %v925, 1.442695
        %v927 = vpow.pop %v926
        %v928 = vadd.f32 %v927, 1.0
        %v929 = vrcp.pop %v928
        %v930 = vmul.f32 1.0, %v929
        %931 = vrot.lane.b32.xlu0 %v585, 32
        %v932 = vpop.permute.xlu0 %931
        %v934 = vmul.f32 %v930, %v932
        %936 = vrot.lane.b32.xlu0 %v934, 64
        %v937 = vpop.permute.xlu0 %936
        %v939 = vadd.f32 %v917, %v937
        %v940 = vtanh.pop %v939
        %v941 = vsub.f32 1.0, %v930
        %943 = vrot.lane.b32.xlu0 %v940, 96
        %v944 = vpop.permute.xlu0 %943
        %v946 = vmul.f32 %v941, %v944
        %v948 = vlaneseq
        %v949 = vshrl.u32 %v948, 7
        %v950 = vsub.s32 0, %v949
        %v951 = vrot.slane %v472, %v950
        %952 = vrot.lane.b32.xlu0 %v951, 32
        %v953 = vpop.permute.xlu0 %952
        %v955 = vmul.f32 %v930, %v953
        %v956 = vadd.f32 %v946, %v955
        %958 = vrot.lane.b32.xlu0 %v956, 96
        %v959 = vpop.permute.xlu0 %958
        %vm961 = vcmask 253952
        %962 = vst.msk [vmem:[#allocation2] sm:$0x1] %vm961, %v959
        %963 = vst.msk [vmem:[#allocation20] sm:$0x1] %vm961, %v959
        %v964 = vsel %vm484, %v759, %v956
        %v965 = vld [vmem:[#allocation17] sm:$0xff]
        %v966 = vld [vmem:[#allocation17 + $0x8] sm:$0xff]
        %v967 = vld [vmem:[#allocation17 + $0x10] sm:$0xff]
        %v968 = vld [vmem:[#allocation17 + $0x18] sm:$0xff]
        %v969 = vld [vmem:[#allocation17 + $0x20] sm:$0xff]
        %v970 = vld [vmem:[#allocation17 + $0x28] sm:$0xff]
        %v971 = vld [vmem:[#allocation17 + $0x30] sm:$0xff]
        %v972 = vld [vmem:[#allocation17 + $0x38] sm:$0xff]
        %v973 = vld [vmem:[%s9 + $0x3] ss:$0 sm:$0xff]
        %v975 = vsel %vm514, %v964, 0
        %977 = vmatprep.subr.mxu0 0.0
        %978 = vmatpush1.msra.mxu0 0.0
        %979 = vmatprep.subr.mxu0 0.0
        %980 = vmatpush1.msra.mxu0 0.0
        %981 = vmatprep.subr.mxu0 0.0
        %982 = vmatpush1.msra.mxu0 0.0
        %983 = vmatprep.subr.mxu0 0.0
        %984 = vmatpush1.msra.mxu0 0.0
        %985 = vmatprep.subr.mxu0 0.0
        %986 = vmatpush1.msra.mxu0 0.0
        %987 = vmatprep.subr.mxu0 0.0
        %988 = vmatpush1.msra.mxu0 0.0
        %989 = vmatprep.subr.mxu0 0.0
        %990 = vmatpush1.msra.mxu0 0.0
        %991 = vmatprep.subr.mxu0 0.0
        %992 = vmatpush1.msra.mxu0 0.0
        %993 = vmatprep.subr.mxu0 0.0
        %994 = vmatpush1.msra.mxu0 %v972
        %995 = vmatprep.subr.mxu0 0.0
        %996 = vmatpush1.msra.mxu0 %v971
        %997 = vmatprep.subr.mxu0 0.0
        %998 = vmatpush1.msra.mxu0 %v970
        %999 = vmatprep.subr.mxu0 0.0
        %1000 = vmatpush1.msra.mxu0 %v969
        %1001 = vmatprep.subr.mxu0 0.0
        %1002 = vmatpush1.msra.mxu0 %v968
        %1003 = vmatprep.subr.mxu0 0.0
        %1004 = vmatpush1.msra.mxu0 %v967
        %1005 = vmatprep.subr.mxu0 0.0
        %1006 = vmatpush1.msra.mxu0 %v966
        %1007 = vmatprep.subr.mxu0 0.0
        %1008 = vmatpush1.msra.mxu0 %v965
        %1009 = vmatprep.subr.mxu0 0.0
        %1010 = vmatpush2.msra.mxu0 0.0
        %1011 = vmatprep.subr.mxu0 0.0
        %1012 = vmatpush2.msra.mxu0 0.0
        %1013 = vmatprep.subr.mxu0 0.0
        %1014 = vmatpush2.msra.mxu0 0.0
        %1015 = vmatprep.subr.mxu0 0.0
        %1016 = vmatpush2.msra.mxu0 0.0
        %1017 = vmatprep.subr.mxu0 0.0
        %1018 = vmatpush2.msra.mxu0 0.0
        %1019 = vmatprep.subr.mxu0 0.0
        %1020 = vmatpush2.msra.mxu0 0.0
        %1021 = vmatprep.subr.mxu0 0.0
        %1022 = vmatpush2.msra.mxu0 0.0
        %1023 = vmatprep.subr.mxu0 0.0
        %1024 = vmatpush2.msra.mxu0 0.0
        %1025 = vmatprep.subr.mxu0 0.0
        %1026 = vmatpush2.msra.mxu0 0.0
        %1027 = vmatprep.subr.mxu0 0.0
        %1028 = vmatpush2.msra.mxu0 0.0
        %1029 = vmatprep.subr.mxu0 0.0
        %1030 = vmatpush2.msra.mxu0 0.0
        %1031 = vmatprep.subr.mxu0 0.0
        %1032 = vmatpush2.msra.mxu0 0.0
        %1033 = vmatprep.subr.mxu0 0.0
        %1034 = vmatpush2.msra.mxu0 0.0
        %1035 = vmatprep.subr.mxu0 0.0
        %1036 = vmatpush2.msra.mxu0 0.0
        %1037 = vmatprep.subr.mxu0 0.0
        %1038 = vmatpush2.msra.mxu0 0.0
        %1039 = vmatprep.subr.mxu0 0.0
        %1040 = vmatpush2.msra.mxu0 0.0
        %1041 = vmatprep.mubr.f32.mxu0 0.0
        %1042 = vmatmul.mubr.f32.gmra.mxu0 %v975
        %v1043 = vpop.f32.mrf.mxu0
        %v1044 = vadd.f32 %v973, %v1043
        %v1045 = vpop.f32.mrf.mxu0
        %1046 = vdwg.mxu0
        %vm1047 = vcmask 1040384
        %v1048 = vsel %vm1047, %v1044, -inf
        %1049 = vmax.xlane.f32.xlu0 %v1048
        %v1050 = vpop.xlane.xlu0 %1049
        %v1051 = vsub.f32 %v1044, %v1050
        %v1052 = vmul.f32 %v1051, 1.442695
        %v1053 = vpow.pop %v1052
        %v1054 = vsel %vm1047, %v1053, 0.0
        %1055 = vadd.xlane.f32.xlu0 %v1054
        %v1056 = vpop.xlane.xlu0 %1055
        %v1057 = vlog2.pop %v1056
        %v1058 = vmul.f32 %v1057, 0.6931472
        %v1059 = vsub.f32 %v1051, %v1058
        %s1060 = scalar_lea.vmem [#allocation19], %s35
        %1061 = vst [vmem:[%s1060] sm:$0x1] %v1059
        // Predicated region
        $region93: #{tpu_custom_call.1} parent=55 // pred_check
          %p1062 = pneg %p237
        $region94: #{tpu_custom_call.1} parent=55 // pred_check_branch
          %1064 = sbr.rel (%p1062) target = $region96
        $region95: #{tpu_custom_call.1} parent=55 // pred_region
          %s1066 = ssub.s32 96, 96
          %1067 = vsyncadd [#allocation7], %s1066
          %s1068 = sshll.u32 [#allocation19], 4
          %s1069 = int_to_ptr.vmem [resolvable:$true] %s1068
          %1074 = dma.vmem_to_hbm [thread:$0]  %s1069, 96, %s10, [#allocation7], 16, 16, 1
        $region96: #{tpu_custom_call.1} parent=55 // pred_fallthru
          _
        // Predicated region
        $region97: #{tpu_custom_call.1} parent=55 // pred_check
          %p1075 = pneg %p258
        $region98: #{tpu_custom_call.1} parent=55 // pred_check_branch
          %1077 = sbr.rel (%p1075) target = $region100
        $region99: #{tpu_custom_call.1} parent=55 // pred_region
          %s1079 = ssub.s32 16, 16
          %1080 = vsyncadd [#allocation21], %s1079
          %s1082 = sshll.u32 [#allocation20], 4
          %s1083 = int_to_ptr.vmem [resolvable:$true] %s1082
          %1085 = dma.vmem_to_hbm [thread:$0]  %s1083, 16, %s11, [#allocation21]
        $region100: #{tpu_custom_call.1} parent=55 // pred_fallthru
          _
        // Predicated region
        $region101: #{tpu_custom_call.1} parent=55 // pred_check
          %p1086 = pneg %p279
        $region102: #{tpu_custom_call.1} parent=55 // pred_check_branch
          %1088 = sbr.rel (%p1086) target = $region104
        $region103: #{tpu_custom_call.1} parent=55 // pred_region
          %s1090 = ssub.s32 96, 96
          %1091 = vsyncadd [#allocation21], %s1090
          %s1092 = sshll.u32 [#allocation22], 4
          %s1093 = int_to_ptr.vmem [resolvable:$true] %s1092
          %1098 = dma.vmem_to_hbm [thread:$0]  %s1093, 96, %s12, [#allocation21], 16, 16, 1
        $region104: #{tpu_custom_call.1} parent=55 // pred_fallthru
          _
        // Predicated region
        $region105: #{tpu_custom_call.1} parent=55 // pred_check
          %p1099 = pneg %p237
        $region106: #{tpu_custom_call.1} parent=55 // pred_check_branch
          %1101 = sbr.rel (%p1099) target = $region108
        $region107: #{tpu_custom_call.1} parent=55 // pred_region
          %1102 = dma.done [#allocation7], 96
        $region108: #{tpu_custom_call.1} parent=55 // pred_fallthru
          _
        // Predicated region
        $region109: #{tpu_custom_call.1} parent=55 // pred_check
          %p1103 = pneg %p258
        $region110: #{tpu_custom_call.1} parent=55 // pred_check_branch
          %1105 = sbr.rel (%p1103) target = $region112
        $region111: #{tpu_custom_call.1} parent=55 // pred_region
          %1106 = dma.done [#allocation21], 16
        $region112: #{tpu_custom_call.1} parent=55 // pred_fallthru
          _
        // Predicated region
        $region113: #{tpu_custom_call.1} parent=55 // pred_check
          %p1107 = pneg %p279
        $region114: #{tpu_custom_call.1} parent=55 // pred_check_branch
          %1109 = sbr.rel (%p1107) target = $region116
        $region115: #{tpu_custom_call.1} parent=55 // pred_region
          %1110 = dma.done [#allocation21], 96
        $region116: #{tpu_custom_call.1} parent=55 // pred_fallthru
          _
      $region56: #{tpu_custom_call.1} parent=5 // pred_fallthru
        _
      %p1111 = scmp.le.s32.totalorder 2, %s30
      // Predicated region
      $region117: #{tpu_custom_call.1} parent=5 // pred_check
        %p1112 = pneg %p1111
      $region118: #{tpu_custom_call.1} parent=5 // pred_check_branch
        %1114 = sbr.rel (%p1112) target = $region120
      $region119: #{tpu_custom_call.1} parent=5 // pred_region
        %s1115 = ssub.s32 %s30, 2
      $region120: #{tpu_custom_call.1} parent=5 // pred_fallthru
        _
    $region6: #{tpu_custom_call.1} parent=1 // loop_footer
      %s34 = sadd.s32 1, %s30
    $region7: #{tpu_custom_call.1} parent=1 // loop_footer_branch
      %29 = sbr.rel target = $region3
    $region8: #{tpu_custom_call.1} parent=1 // loop_exit
      _
    %1116 = vsyncpa [#allocation6], 1
    %s1117 = scalar_lea.sflag [#allocation6], 1
    %1118 = vsyncpa %s1117, 1
    %1119 = vsyncpa [#allocation9], 1
    %1120 = vsyncpa [#allocation12], 1
    %1121 = vsyncpa [#allocation15], 1
    %1122 = vsyncpa [#allocation18], 1
    %1123 = vsyncpa [#allocation7], 1
    %s1124 = scalar_lea.sflag [#allocation7], 1
    %1125 = vsyncpa %s1124, 1
    %1126 = vsyncpa [#allocation21], 1

</llo_original>
